<compile_context>
chip_gen: v7x
topology: tpu7x:2x2x1
jax: 0.10.0
libtpu: 0.0.40
codegen_flags: <defaults>
</compile_context>

<pallas_src>
import functools
import math

import jax
import jax.numpy as jnp
import numpy as np
from jax.experimental import pallas as pl
from jax.experimental.pallas import tpu as pltpu


def basic_stage_attention_kernel(enc_ref, forget_ref, w_ref, out_ref, forget_out_ref,
                                 *, off, S, Din, D, H, d_ff, matmul_dtype, pack_out):
    bt = enc_ref.shape[0]          # batch tile
    rows = bt * S
    W2 = 2 * D

    def mm(a, w):
        return jnp.dot(a.astype(matmul_dtype), w.astype(matmul_dtype),
                       preferred_element_type=jnp.float32)

    # --- static views into the single weight slab (one DMA, resident across the grid) ---
    wqk = w_ref[off["wqk"]:off["wqk"] + Din, 0:W2]   # [Din, 2D] Q||K (scale folded, block-zero)
    wvg = w_ref[off["wvg"]:off["wvg"] + Din, 0:W2]   # [Din, 2D] V || gate-from-forget
    wog = w_ref[off["wog"]:off["wog"] + D, 0:W2]     # [D, 2D]   Wo || Wg_out
    G = w_ref[off["g"]:off["g"] + D, 0:H]            # [D, H]    head membership (0/1)
    GT = w_ref[off["gt"]:off["gt"] + H, 0:D]         # [H, D]    its transpose
    vec = w_ref[off["vec"]:off["vec"] + 8, :]        # bias / vector rows
    bqk = vec[0:1, 0:W2]
    bvg = vec[1:2, 0:W2]
    bo = vec[2:3, 0:D]
    ln_g = vec[3:4, 0:D]
    ln_b = vec[3:4, D:W2]
    b1 = vec[5:6, 0:d_ff]
    b2 = vec[6:7, 0:D]

    # Flatten the batch tile into the sublane dim for all projection / pointwise work.
    enc = enc_ref[...].reshape(rows, Din)
    fgt = forget_ref[...].reshape(rows, Din)

    # --- projections: Q||K in one MXU call, V||gate-partial in one MXU call ---
    # (wqk is block-zero-padded host-side so Q/K only see their half of enc; Q is pre-scaled
    #  by 1/sqrt(d_head).  Note: 0*inf/0*NaN in the unused half would propagate — finite only.)
    qk = mm(enc, wqk) + bqk                          # [rows, 2D]
    vg = mm(fgt, wvg) + bvg                          # [rows, 2D]
    q3 = qk[:, 0:D].reshape(bt, S, D)
    k3 = qk[:, D:W2].reshape(bt, S, D)
    v3 = vg[:, 0:D].reshape(bt, S, D)
    gate_f = vg[:, D:W2]                             # forget @ Wg_f + bg, carried to the end

    # --- attention core: full-lane VPU products + tiny MXU head reduce / expand ---
    prod = q3[:, :, None, :] * k3[:, None, :, :]     # [bt, S, S, D] — all D lanes live
    s4 = jnp.dot(prod.reshape(rows * S, D), G,
                 preferred_element_type=jnp.float32).reshape(bt, S, S, H)
    s4 = s4 - jnp.max(s4, axis=2, keepdims=True)     # softmax over the key axis (f32)
    p4 = jnp.exp(s4)
    a4 = p4 / jnp.sum(p4, axis=2, keepdims=True)
    a_full = jnp.dot(a4.reshape(rows * S, H), GT,
                     preferred_element_type=jnp.float32).reshape(bt, S, S, D)
    ctx = jnp.sum(a_full * v3[:, None, :, :], axis=2).reshape(rows, D)

    # --- output projection, residual='V' (the forget input), LayerNorm (eps=1e-5) ---
    attn_out = mm(ctx, wog[:, 0:D]) + bo
    res = attn_out + fgt                             # wrapper asserts Dout == Din
    mu = jnp.mean(res, axis=-1, keepdims=True)
    var = jnp.mean((res - mu) ** 2, axis=-1, keepdims=True)
    sa = (res - mu) * jax.lax.rsqrt(var + 1e-5) * ln_g + ln_b

    # --- PoswiseFeedForwardNet2 (LN=False): conv1x1 -> ReLU -> conv1x1 + residual ---
    if d_ff == 1:
        # rank-1 FFN on the VPU/XLU; w1 stored transposed ([1, D]) next to w2 in one vec row.
        w1t = vec[4:5, 0:D]
        w2r = vec[4:5, D:W2]
        h = jnp.maximum(jnp.sum(sa * w1t, axis=-1, keepdims=True) + b1, 0.0)   # [rows, 1]
        ff = h * w2r + b2                                                      # [rows, D]
    else:
        w1 = w_ref[off["w1"]:off["w1"] + D, 0:d_ff]
        w2 = w_ref[off["w2"]:off["w2"] + d_ff, 0:D]
        h = jnp.maximum(mm(sa, w1) + b1, 0.0)
        ff = mm(h, w2) + b2
    outputs = ff + sa

    # --- forget gate (concat removed; forget-side partial already fused with V) ---
    gate = mm(outputs, wog[:, D:W2]) + gate_f
    forget_new = outputs * jax.nn.sigmoid(gate)

    if pack_out:
        # Lane-dense stores: [rows, D] -> [bt, S*D] (>=128 lanes) via static slices + lane concat.
        o3 = outputs.reshape(bt, S, D)
        f3 = forget_new.reshape(bt, S, D)
        out_ref[...] = jnp.concatenate([o3[:, s, :] for s in range(S)],
                                       axis=-1).astype(out_ref.dtype)
        forget_out_ref[...] = jnp.concatenate([f3[:, s, :] for s in range(S)],
                                              axis=-1).astype(forget_out_ref.dtype)
    else:
        out_ref[...] = outputs.reshape(bt, S, D).astype(out_ref.dtype)
        forget_out_ref[...] = forget_new.reshape(bt, S, D).astype(forget_out_ref.dtype)


def _pick_batch_tile(B, S, D, max_rows=2048, inter_budget_bytes=8 * 1024 * 1024):
    """Largest divisor of B whose [bt,S,S,D] f32 score intermediates stay within budget."""
    best = 1
    for bt in range(1, B + 1):
        if B % bt:
            continue
        if bt * S > max_rows:
            continue
        if 3 * bt * S * S * D * 4 > inter_budget_bytes:
            continue
        best = bt
    return best


def _build_weight_slab(params, *, Din, D, n_heads, d_ff, inv_scale):
    """Pack every grid-invariant weight/bias into one padded f32 slab with static offsets."""
    half = Din // 2
    W2 = 2 * D
    lanes = ((max(W2, d_ff) + 127) // 128) * 128

    def a8(x):
        return ((x + 7) // 8) * 8

    off, r = {}, 0
    off["wqk"] = r; r = a8(r + Din)
    off["wvg"] = r; r = a8(r + Din)
    off["wog"] = r; r = a8(r + D)
    if d_ff != 1:
        off["w1"] = r; r = a8(r + D)
        off["w2"] = r; r = a8(r + d_ff)
    off["g"] = r; r = a8(r + D)
    off["gt"] = r; r = a8(r + n_heads)
    off["vec"] = r; r = a8(r + 8)
    R = r

    slab = jnp.zeros((R, lanes), jnp.float32)
    # Q||K block weight: zero blocks make Q/K depend only on their half of enc (exact for
    # finite inputs); 1/sqrt(d_head) folded into the Q block.
    slab = slab.at[off["wqk"]:off["wqk"] + half, 0:D].set(params["wq"] * inv_scale)
    slab = slab.at[off["wqk"] + half:off["wqk"] + Din, D:W2].set(params["wk"])
    # V || forget-side gate weight (wg rows [D:] multiply `forget` in cat(outputs, forget)).
    slab = slab.at[off["wvg"]:off["wvg"] + Din, 0:D].set(params["wv"])
    slab = slab.at[off["wvg"]:off["wvg"] + Din, D:W2].set(params["wg"][D:])
    # Wo || outputs-side gate weight (wg rows [:D] multiply `outputs`).
    slab = slab.at[off["wog"]:off["wog"] + D, 0:D].set(params["wo"])
    slab = slab.at[off["wog"]:off["wog"] + D, D:W2].set(params["wg"][:D])
    if d_ff != 1:
        slab = slab.at[off["w1"]:off["w1"] + D, 0:d_ff].set(params["w1"])
        slab = slab.at[off["w2"]:off["w2"] + d_ff, 0:D].set(params["w2"])
    # Head-membership matrix (0/1) and its transpose: segmented lane reduce / expand on MXU.
    d_head = D // n_heads
    g_np = (np.arange(D)[:, None] // d_head == np.arange(n_heads)[None, :]).astype(np.float32)
    slab = slab.at[off["g"]:off["g"] + D, 0:n_heads].set(jnp.asarray(g_np))
    slab = slab.at[off["gt"]:off["gt"] + n_heads, 0:D].set(jnp.asarray(g_np.T))
    # Bias / vector rows.
    v0 = off["vec"]
    slab = slab.at[v0 + 0, 0:D].set(params["bq"][0] * inv_scale)
    slab = slab.at[v0 + 0, D:W2].set(params["bk"][0])
    slab = slab.at[v0 + 1, 0:D].set(params["bv"][0])
    slab = slab.at[v0 + 1, D:W2].set(params["bg"][0])
    slab = slab.at[v0 + 2, 0:D].set(params["bo"][0])
    slab = slab.at[v0 + 3, 0:D].set(params["ln_g"][0])
    slab = slab.at[v0 + 3, D:W2].set(params["ln_b"][0])
    if d_ff == 1:
        slab = slab.at[v0 + 4, 0:D].set(params["w1"][:, 0])    # w1 [D,1] stored transposed
        slab = slab.at[v0 + 4, D:W2].set(params["w2"][0])      # w2 [1,D]
    slab = slab.at[v0 + 5, 0:d_ff].set(params["b1"][0])
    slab = slab.at[v0 + 6, 0:D].set(params["b2"][0])
    return slab, off, R, lanes


def basic_stage_attention(enc_inputs, forget, params, *, n_heads,
                          matmul_dtype=jnp.float32):
    B, S, Din = enc_inputs.shape
    D = params["wo"].shape[1]
    assert D == Din, "residual='V' (attn_out + forget) requires output_dim == input_dim"
    assert D % n_heads == 0, "output_dim must be divisible by n_heads"
    d_ff = params["w1"].shape[1]
    d_head = D // n_heads
    inv_scale = 1.0 / math.sqrt(d_head)

    slab, off, R, lanes = _build_weight_slab(
        params, Din=Din, D=D, n_heads=n_heads, d_ff=d_ff, inv_scale=inv_scale)

    bt = _pick_batch_tile(B, S, D)
    grid = (B // bt,)
    # Lane-dense stores only when the packed row is 128-lane aligned and the batch-tile block
    # shape stays legal (bt == B or a multiple of the 8-sublane tile).
    pack_out = (S * D) % 128 == 0 and (bt == B or bt % 8 == 0)

    kernel = functools.partial(
        basic_stage_attention_kernel, off=off, S=S, Din=Din, D=D, H=n_heads,
        d_ff=d_ff, matmul_dtype=matmul_dtype, pack_out=pack_out)

    in_specs = [pl.BlockSpec((bt, S, Din), lambda g: (g, 0, 0)),
                pl.BlockSpec((bt, S, Din), lambda g: (g, 0, 0)),
                pl.BlockSpec((R, lanes), lambda g: (0, 0))]     # grid-invariant weight slab
    if pack_out:
        out_shape = (jax.ShapeDtypeStruct((B, S * D), jnp.float32),
                     jax.ShapeDtypeStruct((B, S * D), jnp.float32))
        out_specs = (pl.BlockSpec((bt, S * D), lambda g: (g, 0)),
                     pl.BlockSpec((bt, S * D), lambda g: (g, 0)))
    else:
        out_shape = (jax.ShapeDtypeStruct((B, S, D), jnp.float32),
                     jax.ShapeDtypeStruct((B, S, D), jnp.float32))
        out_specs = (pl.BlockSpec((bt, S, D), lambda g: (g, 0, 0)),
                     pl.BlockSpec((bt, S, D), lambda g: (g, 0, 0)))

    flops = (4 * B * S * Din * 2 * D                 # Q||K and V||gate projections
             + B * S * S * D                         # q*k elementwise
             + 4 * B * S * S * D * n_heads           # head reduce + expand matmuls
             + 2 * B * S * S * D                     # attention-weighted V
             + 4 * B * S * D * D                     # output proj + gate proj
             + 4 * B * S * D * max(d_ff, 1)          # FFN
             + 12 * B * S * D)                       # LN / residual / gate elementwise
    cost = pl.CostEstimate(
        flops=flops,
        transcendentals=B * S * S * n_heads + B * S * D + B * S,
        bytes_accessed=4 * (2 * B * S * Din + 2 * B * S * D + R * lanes))

    outputs, forget_new = pl.pallas_call(
        kernel,
        grid=grid,
        in_specs=in_specs,
        out_specs=out_specs,
        out_shape=out_shape,
        compiler_params=pltpu.CompilerParams(
            dimension_semantics=("parallel",),        # megacore-shardable on v7x
            vmem_limit_bytes=32 * 1024 * 1024),
        cost_estimate=cost,
    )(enc_inputs, forget, slab)

    if pack_out:
        outputs = outputs.reshape(B, S, D)
        forget_new = forget_new.reshape(B, S, D)
    return outputs, forget_new


def reference(enc_inputs, forget, params, *, n_heads):
    B, S, Din = enc_inputs.shape
    Dout = params["wo"].shape[1]
    dh = Dout // n_heads
    half = Din // 2
    x1 = enc_inputs[:, :, :half]
    x2 = enc_inputs[:, :, half:]
    q = (x1 @ params["wq"] + params["bq"]).reshape(B, S, n_heads, dh).transpose(0, 2, 1, 3)
    k = (x2 @ params["wk"] + params["bk"]).reshape(B, S, n_heads, dh).transpose(0, 2, 1, 3)
    v = (forget @ params["wv"] + params["bv"]).reshape(B, S, n_heads, dh).transpose(0, 2, 1, 3)
    s = jnp.einsum('bhqd,bhkd->bhqk', q, k) / math.sqrt(dh)
    a = jax.nn.softmax(s, axis=-1)
    ctx = jnp.einsum('bhqk,bhkd->bhqd', a, v).transpose(0, 2, 1, 3).reshape(B, S, n_heads * dh)
    ao = ctx @ params["wo"] + params["bo"]
    res = ao + forget
    mu = res.mean(-1, keepdims=True)
    var = ((res - mu) ** 2).mean(-1, keepdims=True)
    sa = (res - mu) * jax.lax.rsqrt(var + 1e-5) * params["ln_g"] + params["ln_b"]
    h = jnp.maximum(sa @ params["w1"] + params["b1"], 0.0)
    outputs = h @ params["w2"] + params["b2"] + sa
    gate = jnp.concatenate([outputs, forget], -1) @ params["wg"] + params["bg"]
    return outputs, outputs * jax.nn.sigmoid(gate)


def init_params(key, input_dim, output_dim, n_heads, d_ff):
    ks = jax.random.split(key, 16)
    half = input_dim // 2

    def lin(k, fan_in, fan_out):
        bound = 1.0 / math.sqrt(fan_in)
        kw, kb = jax.random.split(k)
        w = jax.random.uniform(kw, (fan_in, fan_out), jnp.float32, -bound, bound)
        b = jax.random.uniform(kb, (1, fan_out), jnp.float32, -bound, bound)
        return w, b

    wq, bq = lin(ks[0], half, output_dim)
    wk, bk = lin(ks[1], half, output_dim)
    wv, bv = lin(ks[2], input_dim, output_dim)
    wo, bo = lin(ks[3], output_dim, output_dim)
    w1, b1 = lin(ks[4], output_dim, d_ff)      # Conv1d(output_dim, d_ff, 1)
    w2, b2 = lin(ks[5], d_ff, output_dim)      # Conv1d(d_ff, output_dim, 1)
    wg, bg = lin(ks[6], output_dim + input_dim, output_dim)
    return dict(
        wq=wq, bq=bq, wk=wk, bk=bk, wv=wv, bv=bv, wo=wo, bo=bo,
        ln_g=jnp.ones((1, output_dim), jnp.float32),
        ln_b=jnp.zeros((1, output_dim), jnp.float32),
        w1=w1, b1=b1, w2=w2, b2=b2, wg=wg, bg=bg,
    )


if __name__ == "__main__":
    B, S = 2, 8
    input_dim, output_dim, n_heads, d_ff = 32, 32, 4, 1   # residual='V' needs out==in dim

    key = jax.random.PRNGKey(0)
    k_enc, k_fgt, k_par = jax.random.split(key, 3)
    enc_inputs = jax.random.normal(k_enc, (B, S, input_dim), jnp.float32)
    forget = jax.random.normal(k_fgt, (B, S, input_dim), jnp.float32)
    params = init_params(k_par, input_dim, output_dim, n_heads, d_ff)

    outputs, forget_new = basic_stage_attention(enc_inputs, forget, params, n_heads=n_heads)
    jax.block_until_ready((outputs, forget_new))

    ref_out, ref_fgt = reference(enc_inputs, forget, params, n_heads=n_heads)
    np.testing.assert_allclose(np.asarray(outputs), np.asarray(ref_out), rtol=1e-4, atol=1e-4)
    np.testing.assert_allclose(np.asarray(forget_new), np.asarray(ref_fgt), rtol=1e-4, atol=1e-4)

    print("KERNEL_OK")
</pallas_src>

<mosaic_0001>
module attributes {stable_mosaic.version = 11 : i64} {
  func.func @basic_stage_attention_kernel(%arg0: i32, %arg1: memref<2x8x32xf32, #tpu.memory_space<vmem>>, %arg2: memref<2x8x32xf32, #tpu.memory_space<vmem>>, %arg3: memref<144x128xf32, #tpu.memory_space<vmem>>, %arg4: memref<2x256xf32, #tpu.memory_space<vmem>>, %arg5: memref<2x256xf32, #tpu.memory_space<vmem>>) attributes {dimension_semantics = [#tpu.dimension_semantics<parallel>], iteration_bounds = array<i64: 1>, scalar_prefetch = 0 : i64, scratch_operands = 0 : i64, tpu.core_type = #tpu.core_type<tc>, window_params = [{transform_indices = @transform_0, window_bounds = array<i64: 2, 8, 32>}, {transform_indices = @transform_1, window_bounds = array<i64: 2, 8, 32>}, {pipeline_mode = #tpu.pipeline_mode<synchronous>, transform_indices = @transform_2, window_bounds = array<i64: 144, 128>}, {transform_indices = @transform_3, window_bounds = array<i64: 2, 256>}, {transform_indices = @transform_4, window_bounds = array<i64: 2, 256>}]} {
    %c0 = arith.constant 0 : index
    %c0_0 = arith.constant 0 : index
    %0 = vector.load %arg3[%c0, %c0_0] : memref<144x128xf32, #tpu.memory_space<vmem>>, vector<32x64xf32>
    %c32 = arith.constant 32 : index
    %c0_1 = arith.constant 0 : index
    %1 = vector.load %arg3[%c32, %c0_1] : memref<144x128xf32, #tpu.memory_space<vmem>>, vector<32x64xf32>
    %c64 = arith.constant 64 : index
    %c0_2 = arith.constant 0 : index
    %2 = vector.load %arg3[%c64, %c0_2] : memref<144x128xf32, #tpu.memory_space<vmem>>, vector<32x64xf32>
    %c96 = arith.constant 96 : index
    %c0_3 = arith.constant 0 : index
    %3 = vector.load %arg3[%c96, %c0_3] : memref<144x128xf32, #tpu.memory_space<vmem>>, vector<32x4xf32>
    %c128 = arith.constant 128 : index
    %c0_4 = arith.constant 0 : index
    %4 = vector.load %arg3[%c128, %c0_4] : memref<144x128xf32, #tpu.memory_space<vmem>>, vector<4x32xf32>
    %c136 = arith.constant 136 : index
    %c0_5 = arith.constant 0 : index
    %5 = vector.load %arg3[%c136, %c0_5] : memref<144x128xf32, #tpu.memory_space<vmem>>, vector<8x128xf32>
    %6 = vector.extract_strided_slice %5 {offsets = [0, 0], sizes = [1, 64], strides = [1, 1]} : vector<8x128xf32> to vector<1x64xf32>
    %7 = vector.extract_strided_slice %5 {offsets = [1, 0], sizes = [1, 64], strides = [1, 1]} : vector<8x128xf32> to vector<1x64xf32>
    %8 = vector.extract_strided_slice %5 {offsets = [2, 0], sizes = [1, 32], strides = [1, 1]} : vector<8x128xf32> to vector<1x32xf32>
    %9 = vector.extract_strided_slice %5 {offsets = [3, 0], sizes = [1, 32], strides = [1, 1]} : vector<8x128xf32> to vector<1x32xf32>
    %10 = vector.extract_strided_slice %5 {offsets = [3, 32], sizes = [1, 32], strides = [1, 1]} : vector<8x128xf32> to vector<1x32xf32>
    %11 = vector.extract_strided_slice %5 {offsets = [5, 0], sizes = [1, 1], strides = [1, 1]} : vector<8x128xf32> to vector<1x1xf32>
    %12 = vector.extract_strided_slice %5 {offsets = [6, 0], sizes = [1, 32], strides = [1, 1]} : vector<8x128xf32> to vector<1x32xf32>
    %c0_6 = arith.constant 0 : index
    %c0_7 = arith.constant 0 : index
    %c0_8 = arith.constant 0 : index
    %13 = vector.load %arg1[%c0_6, %c0_7, %c0_8] : memref<2x8x32xf32, #tpu.memory_space<vmem>>, vector<2x8x32xf32>
    %14 = vector.shape_cast %13 : vector<2x8x32xf32> to vector<16x32xf32>
    %c0_9 = arith.constant 0 : index
    %c0_10 = arith.constant 0 : index
    %c0_11 = arith.constant 0 : index
    %15 = vector.load %arg2[%c0_9, %c0_10, %c0_11] : memref<2x8x32xf32, #tpu.memory_space<vmem>>, vector<2x8x32xf32>
    %16 = vector.shape_cast %15 : vector<2x8x32xf32> to vector<16x32xf32>
    %cst = arith.constant dense<0.000000e+00> : vector<16x64xf32>
    %17 = tpu.matmul %14, %0, %cst {dimension_numbers = #tpu.dot_dimension_numbers<[1], [0], [0], [1], [0, 0, 1, 1], [], []>} : vector<16x32xf32>, vector<32x64xf32>, vector<16x64xf32> -> vector<16x64xf32>
    %18 = vector.broadcast %6 : vector<1x64xf32> to vector<16x64xf32>
    %19 = arith.addf %17, %18 : vector<16x64xf32>
    %cst_12 = arith.constant dense<0.000000e+00> : vector<16x64xf32>
    %20 = tpu.matmul %16, %1, %cst_12 {dimension_numbers = #tpu.dot_dimension_numbers<[1], [0], [0], [1], [0, 0, 1, 1], [], []>} : vector<16x32xf32>, vector<32x64xf32>, vector<16x64xf32> -> vector<16x64xf32>
    %21 = vector.broadcast %7 : vector<1x64xf32> to vector<16x64xf32>
    %22 = arith.addf %20, %21 : vector<16x64xf32>
    %23 = vector.extract_strided_slice %19 {offsets = [0, 0], sizes = [16, 32], strides = [1, 1]} : vector<16x64xf32> to vector<16x32xf32>
    %24 = vector.shape_cast %23 : vector<16x32xf32> to vector<2x8x32xf32>
    %25 = vector.extract_strided_slice %19 {offsets = [0, 32], sizes = [16, 32], strides = [1, 1]} : vector<16x64xf32> to vector<16x32xf32>
    %26 = vector.shape_cast %25 : vector<16x32xf32> to vector<2x8x32xf32>
    %27 = vector.extract_strided_slice %22 {offsets = [0, 0], sizes = [16, 32], strides = [1, 1]} : vector<16x64xf32> to vector<16x32xf32>
    %28 = vector.shape_cast %27 : vector<16x32xf32> to vector<2x8x32xf32>
    %29 = vector.extract_strided_slice %22 {offsets = [0, 32], sizes = [16, 32], strides = [1, 1]} : vector<16x64xf32> to vector<16x32xf32>
    %30 = vector.shape_cast %24 : vector<2x8x32xf32> to vector<2x8x1x32xf32>
    %31 = vector.shape_cast %26 : vector<2x8x32xf32> to vector<2x1x8x32xf32>
    %32 = vector.broadcast %30 : vector<2x8x1x32xf32> to vector<2x8x8x32xf32>
    %33 = vector.broadcast %31 : vector<2x1x8x32xf32> to vector<2x8x8x32xf32>
    %34 = arith.mulf %32, %33 : vector<2x8x8x32xf32>
    %35 = vector.shape_cast %34 : vector<2x8x8x32xf32> to vector<128x32xf32>
    %cst_13 = arith.constant dense<0.000000e+00> : vector<128x4xf32>
    %36 = tpu.matmul %35, %3, %cst_13 {dimension_numbers = #tpu.dot_dimension_numbers<[1], [0], [0], [1], [0, 0, 1, 1], [], []>} : vector<128x32xf32>, vector<32x4xf32>, vector<128x4xf32> -> vector<128x4xf32>
    %37 = vector.shape_cast %36 : vector<128x4xf32> to vector<2x8x8x4xf32>
    %cst_14 = arith.constant dense<0xFF800000> : vector<2x8x4xf32>
    %38 = vector.multi_reduction <maximumf>, %37, %cst_14 [2] : vector<2x8x8x4xf32> to vector<2x8x4xf32>
    %39 = vector.shape_cast %38 : vector<2x8x4xf32> to vector<2x8x1x4xf32>
    %40 = vector.broadcast %39 : vector<2x8x1x4xf32> to vector<2x8x8x4xf32>
    %41 = arith.subf %37, %40 : vector<2x8x8x4xf32>
    %42 = math.exp %41 : vector<2x8x8x4xf32>
    %cst_15 = arith.constant dense<0.000000e+00> : vector<2x8x4xf32>
    %43 = vector.multi_reduction <add>, %42, %cst_15 [2] : vector<2x8x8x4xf32> to vector<2x8x4xf32>
    %44 = vector.shape_cast %43 : vector<2x8x4xf32> to vector<2x8x1x4xf32>
    %45 = vector.broadcast %44 : vector<2x8x1x4xf32> to vector<2x8x8x4xf32>
    %46 = arith.divf %42, %45 : vector<2x8x8x4xf32>
    %47 = vector.shape_cast %46 : vector<2x8x8x4xf32> to vector<128x4xf32>
    %cst_16 = arith.constant dense<0.000000e+00> : vector<128x32xf32>
    %48 = tpu.matmul %47, %4, %cst_16 {dimension_numbers = #tpu.dot_dimension_numbers<[1], [0], [0], [1], [0, 0, 1, 1], [], []>} : vector<128x4xf32>, vector<4x32xf32>, vector<128x32xf32> -> vector<128x32xf32>
    %49 = vector.shape_cast %48 : vector<128x32xf32> to vector<2x8x8x32xf32>
    %50 = vector.shape_cast %28 : vector<2x8x32xf32> to vector<2x1x8x32xf32>
    %51 = vector.broadcast %50 : vector<2x1x8x32xf32> to vector<2x8x8x32xf32>
    %52 = arith.mulf %49, %51 : vector<2x8x8x32xf32>
    %cst_17 = arith.constant dense<0.000000e+00> : vector<2x8x32xf32>
    %53 = vector.multi_reduction <add>, %52, %cst_17 [2] : vector<2x8x8x32xf32> to vector<2x8x32xf32>
    %54 = vector.shape_cast %53 : vector<2x8x32xf32> to vector<16x32xf32>
    %55 = vector.extract_strided_slice %2 {offsets = [0, 0], sizes = [32, 32], strides = [1, 1]} : vector<32x64xf32> to vector<32x32xf32>
    %cst_18 = arith.constant dense<0.000000e+00> : vector<16x32xf32>
    %56 = tpu.matmul %54, %55, %cst_18 {dimension_numbers = #tpu.dot_dimension_numbers<[1], [0], [0], [1], [0, 0, 1, 1], [], []>} : vector<16x32xf32>, vector<32x32xf32>, vector<16x32xf32> -> vector<16x32xf32>
    %57 = vector.broadcast %8 : vector<1x32xf32> to vector<16x32xf32>
    %58 = arith.addf %56, %57 : vector<16x32xf32>
    %59 = arith.addf %58, %16 : vector<16x32xf32>
    %cst_19 = arith.constant dense<0.000000e+00> : vector<16xf32>
    %60 = vector.multi_reduction <add>, %59, %cst_19 [1] : vector<16x32xf32> to vector<16xf32>
    %61 = vector.shape_cast %60 : vector<16xf32> to vector<16x1xf32>
    %cst_20 = arith.constant 3.200000e+01 : f32
    %62 = vector.broadcast %cst_20 : f32 to vector<16x1xf32>
    %63 = arith.divf %61, %62 : vector<16x1xf32>
    %64 = vector.broadcast %63 : vector<16x1xf32> to vector<16x32xf32>
    %65 = arith.subf %59, %64 : vector<16x32xf32>
    %66 = arith.mulf %65, %65 : vector<16x32xf32>
    %cst_21 = arith.constant dense<0.000000e+00> : vector<16xf32>
    %67 = vector.multi_reduction <add>, %66, %cst_21 [1] : vector<16x32xf32> to vector<16xf32>
    %68 = vector.shape_cast %67 : vector<16xf32> to vector<16x1xf32>
    %cst_22 = arith.constant 3.200000e+01 : f32
    %69 = vector.broadcast %cst_22 : f32 to vector<16x1xf32>
    %70 = arith.divf %68, %69 : vector<16x1xf32>
    %71 = vector.broadcast %63 : vector<16x1xf32> to vector<16x32xf32>
    %72 = arith.subf %59, %71 : vector<16x32xf32>
    %cst_23 = arith.constant 9.99999974E-6 : f32
    %73 = vector.broadcast %cst_23 : f32 to vector<16x1xf32>
    %74 = arith.addf %70, %73 : vector<16x1xf32>
    %75 = math.rsqrt %74 : vector<16x1xf32>
    %76 = vector.broadcast %75 : vector<16x1xf32> to vector<16x32xf32>
    %77 = arith.mulf %72, %76 : vector<16x32xf32>
    %78 = vector.broadcast %9 : vector<1x32xf32> to vector<16x32xf32>
    %79 = arith.mulf %77, %78 : vector<16x32xf32>
    %80 = vector.broadcast %10 : vector<1x32xf32> to vector<16x32xf32>
    %81 = arith.addf %79, %80 : vector<16x32xf32>
    %82 = vector.extract_strided_slice %5 {offsets = [4, 0], sizes = [1, 32], strides = [1, 1]} : vector<8x128xf32> to vector<1x32xf32>
    %83 = vector.extract_strided_slice %5 {offsets = [4, 32], sizes = [1, 32], strides = [1, 1]} : vector<8x128xf32> to vector<1x32xf32>
    %84 = vector.broadcast %82 : vector<1x32xf32> to vector<16x32xf32>
    %85 = arith.mulf %81, %84 : vector<16x32xf32>
    %cst_24 = arith.constant dense<0.000000e+00> : vector<16xf32>
    %86 = vector.multi_reduction <add>, %85, %cst_24 [1] : vector<16x32xf32> to vector<16xf32>
    %87 = vector.shape_cast %86 : vector<16xf32> to vector<16x1xf32>
    %88 = vector.broadcast %11 : vector<1x1xf32> to vector<16x1xf32>
    %89 = arith.addf %87, %88 : vector<16x1xf32>
    %cst_25 = arith.constant 0.000000e+00 : f32
    %90 = vector.broadcast %cst_25 : f32 to vector<16x1xf32>
    %91 = arith.maximumf %89, %90 : vector<16x1xf32>
    %92 = vector.broadcast %91 : vector<16x1xf32> to vector<16x32xf32>
    %93 = vector.broadcast %83 : vector<1x32xf32> to vector<16x32xf32>
    %94 = arith.mulf %92, %93 : vector<16x32xf32>
    %95 = vector.broadcast %12 : vector<1x32xf32> to vector<16x32xf32>
    %96 = arith.addf %94, %95 : vector<16x32xf32>
    %97 = arith.addf %96, %81 : vector<16x32xf32>
    %98 = vector.extract_strided_slice %2 {offsets = [0, 32], sizes = [32, 32], strides = [1, 1]} : vector<32x64xf32> to vector<32x32xf32>
    %cst_26 = arith.constant dense<0.000000e+00> : vector<16x32xf32>
    %99 = tpu.matmul %97, %98, %cst_26 {dimension_numbers = #tpu.dot_dimension_numbers<[1], [0], [0], [1], [0, 0, 1, 1], [], []>} : vector<16x32xf32>, vector<32x32xf32>, vector<16x32xf32> -> vector<16x32xf32>
    %100 = arith.addf %99, %29 : vector<16x32xf32>
    %101 = arith.negf %100 : vector<16x32xf32>
    %102 = math.exp %101 : vector<16x32xf32>
    %cst_27 = arith.constant 1.000000e+00 : f32
    %103 = vector.broadcast %cst_27 : f32 to vector<16x32xf32>
    %104 = arith.addf %103, %102 : vector<16x32xf32>
    %105 = arith.divf %103, %104 : vector<16x32xf32>
    %106 = arith.mulf %97, %105 : vector<16x32xf32>
    %107 = vector.shape_cast %97 : vector<16x32xf32> to vector<2x8x32xf32>
    %108 = vector.shape_cast %106 : vector<16x32xf32> to vector<2x8x32xf32>
    %109 = vector.extract_strided_slice %107 {offsets = [0, 0, 0], sizes = [2, 1, 32], strides = [1, 1, 1]} : vector<2x8x32xf32> to vector<2x1x32xf32>
    %110 = vector.shape_cast %109 : vector<2x1x32xf32> to vector<2x32xf32>
    %111 = vector.extract_strided_slice %107 {offsets = [0, 1, 0], sizes = [2, 1, 32], strides = [1, 1, 1]} : vector<2x8x32xf32> to vector<2x1x32xf32>
    %112 = vector.shape_cast %111 : vector<2x1x32xf32> to vector<2x32xf32>
    %113 = vector.extract_strided_slice %107 {offsets = [0, 2, 0], sizes = [2, 1, 32], strides = [1, 1, 1]} : vector<2x8x32xf32> to vector<2x1x32xf32>
    %114 = vector.shape_cast %113 : vector<2x1x32xf32> to vector<2x32xf32>
    %115 = vector.extract_strided_slice %107 {offsets = [0, 3, 0], sizes = [2, 1, 32], strides = [1, 1, 1]} : vector<2x8x32xf32> to vector<2x1x32xf32>
    %116 = vector.shape_cast %115 : vector<2x1x32xf32> to vector<2x32xf32>
    %117 = vector.extract_strided_slice %107 {offsets = [0, 4, 0], sizes = [2, 1, 32], strides = [1, 1, 1]} : vector<2x8x32xf32> to vector<2x1x32xf32>
    %118 = vector.shape_cast %117 : vector<2x1x32xf32> to vector<2x32xf32>
    %119 = vector.extract_strided_slice %107 {offsets = [0, 5, 0], sizes = [2, 1, 32], strides = [1, 1, 1]} : vector<2x8x32xf32> to vector<2x1x32xf32>
    %120 = vector.shape_cast %119 : vector<2x1x32xf32> to vector<2x32xf32>
    %121 = vector.extract_strided_slice %107 {offsets = [0, 6, 0], sizes = [2, 1, 32], strides = [1, 1, 1]} : vector<2x8x32xf32> to vector<2x1x32xf32>
    %122 = vector.shape_cast %121 : vector<2x1x32xf32> to vector<2x32xf32>
    %123 = vector.extract_strided_slice %107 {offsets = [0, 7, 0], sizes = [2, 1, 32], strides = [1, 1, 1]} : vector<2x8x32xf32> to vector<2x1x32xf32>
    %124 = vector.shape_cast %123 : vector<2x1x32xf32> to vector<2x32xf32>
    %125 = tpu.concatenate %110, %112, %114, %116, %118, %120, %122, %124 in 1 : vector<2x32xf32>, vector<2x32xf32>, vector<2x32xf32>, vector<2x32xf32>, vector<2x32xf32>, vector<2x32xf32>, vector<2x32xf32>, vector<2x32xf32> -> vector<2x256xf32>
    %c0_28 = arith.constant 0 : index
    %c0_29 = arith.constant 0 : index
    %126 = vector.load %arg4[%c0_28, %c0_29] : memref<2x256xf32, #tpu.memory_space<vmem>>, vector<2x256xf32>
    tpu.vector_store %arg4[%c0_28, %c0_29], %125 {strides = array<i32>} : memref<2x256xf32, #tpu.memory_space<vmem>>, vector<2x256xf32>,
    %127 = vector.extract_strided_slice %108 {offsets = [0, 0, 0], sizes = [2, 1, 32], strides = [1, 1, 1]} : vector<2x8x32xf32> to vector<2x1x32xf32>
    %128 = vector.shape_cast %127 : vector<2x1x32xf32> to vector<2x32xf32>
    %129 = vector.extract_strided_slice %108 {offsets = [0, 1, 0], sizes = [2, 1, 32], strides = [1, 1, 1]} : vector<2x8x32xf32> to vector<2x1x32xf32>
    %130 = vector.shape_cast %129 : vector<2x1x32xf32> to vector<2x32xf32>
    %131 = vector.extract_strided_slice %108 {offsets = [0, 2, 0], sizes = [2, 1, 32], strides = [1, 1, 1]} : vector<2x8x32xf32> to vector<2x1x32xf32>
    %132 = vector.shape_cast %131 : vector<2x1x32xf32> to vector<2x32xf32>
    %133 = vector.extract_strided_slice %108 {offsets = [0, 3, 0], sizes = [2, 1, 32], strides = [1, 1, 1]} : vector<2x8x32xf32> to vector<2x1x32xf32>
    %134 = vector.shape_cast %133 : vector<2x1x32xf32> to vector<2x32xf32>
    %135 = vector.extract_strided_slice %108 {offsets = [0, 4, 0], sizes = [2, 1, 32], strides = [1, 1, 1]} : vector<2x8x32xf32> to vector<2x1x32xf32>
    %136 = vector.shape_cast %135 : vector<2x1x32xf32> to vector<2x32xf32>
    %137 = vector.extract_strided_slice %108 {offsets = [0, 5, 0], sizes = [2, 1, 32], strides = [1, 1, 1]} : vector<2x8x32xf32> to vector<2x1x32xf32>
    %138 = vector.shape_cast %137 : vector<2x1x32xf32> to vector<2x32xf32>
    %139 = vector.extract_strided_slice %108 {offsets = [0, 6, 0], sizes = [2, 1, 32], strides = [1, 1, 1]} : vector<2x8x32xf32> to vector<2x1x32xf32>
    %140 = vector.shape_cast %139 : vector<2x1x32xf32> to vector<2x32xf32>
    %141 = vector.extract_strided_slice %108 {offsets = [0, 7, 0], sizes = [2, 1, 32], strides = [1, 1, 1]} : vector<2x8x32xf32> to vector<2x1x32xf32>
    %142 = vector.shape_cast %141 : vector<2x1x32xf32> to vector<2x32xf32>
    %143 = tpu.concatenate %128, %130, %132, %134, %136, %138, %140, %142 in 1 : vector<2x32xf32>, vector<2x32xf32>, vector<2x32xf32>, vector<2x32xf32>, vector<2x32xf32>, vector<2x32xf32>, vector<2x32xf32>, vector<2x32xf32> -> vector<2x256xf32>
    %c0_30 = arith.constant 0 : index
    %c0_31 = arith.constant 0 : index
    %144 = vector.load %arg5[%c0_30, %c0_31] : memref<2x256xf32, #tpu.memory_space<vmem>>, vector<2x256xf32>
    tpu.vector_store %arg5[%c0_30, %c0_31], %143 {strides = array<i32>} : memref<2x256xf32, #tpu.memory_space<vmem>>, vector<2x256xf32>,
    return
  }
  func.func @transform_0(%arg0: i32) -> (i32, i32, i32) {
    %c0_i32 = arith.constant 0 : i32
    %c0_i32_0 = arith.constant 0 : i32
    %c0_i32_1 = arith.constant 0 : i32
    return %arg0, %c0_i32, %c0_i32_0 : i32, i32, i32
  }
  func.func @transform_1(%arg0: i32) -> (i32, i32, i32) {
    %c0_i32 = arith.constant 0 : i32
    %c0_i32_0 = arith.constant 0 : i32
    %c0_i32_1 = arith.constant 0 : i32
    return %arg0, %c0_i32, %c0_i32_0 : i32, i32, i32
  }
  func.func @transform_2(%arg0: i32) -> (i32, i32) {
    %c0_i32 = arith.constant 0 : i32
    %c0_i32_0 = arith.constant 0 : i32
    %c0_i32_1 = arith.constant 0 : i32
    return %c0_i32, %c0_i32_0 : i32, i32
  }
  func.func @transform_3(%arg0: i32) -> (i32, i32) {
    %c0_i32 = arith.constant 0 : i32
    %c0_i32_0 = arith.constant 0 : i32
    return %arg0, %c0_i32 : i32, i32
  }
  func.func @transform_4(%arg0: i32) -> (i32, i32) {
    %c0_i32 = arith.constant 0 : i32
    %c0_i32_0 = arith.constant 0 : i32
    return %arg0, %c0_i32 : i32, i32
  }
}

</mosaic_0001>

<llo_original>
// kernel: tpu_custom_call.1
$region0: #{tpu_custom_call.1}
  #allocation0 [shape = 'u32[]', space=smem, size = 0x4, offset = 0x4, fixed_abs, tag = 'smem constant byte address 0x4 - core index']
  #allocation1 [shape = 'u32[144,128]{1,0:T(1,128)}', space=vmem, size = 0x12000, scoped, tag = 'internal scratch']
  %s0 = inlined_call_operand.hbm [shape: f32[2,8,32], index: 0, kind: input, shape index: {}]
  %s1 = inlined_call_operand.hbm [shape: f32[2,8,32], index: 1, kind: input, shape index: {}]
  %s2 = inlined_call_operand.hbm [shape: f32[144,128], index: 2, kind: input, shape index: {}]
  %s3 = inlined_call_operand.hbm [shape: f32[2,256], index: 3, kind: output, shape index: {0}]
  %s4 = inlined_call_operand.hbm [shape: f32[2,256], index: 4, kind: output, shape index: {1}]
  %5 = xla_tuple %s3, %s4
  %s6 = sld [smem:[#allocation0]]
  $region42: #{tpu_custom_call.1} parent=0
    _
  %s8 = ssub.s32 1, %s6
  %s9 = scalar_select 0, %s8, %s6
  $region1: #{tpu_custom_call.1} parent=0
    #allocation2 [shape = 'u8[8192]{0}', space=vmem, size = 0x2000, scoped, tag = 'input window, operand 0, single buffered']
    #allocation3 [shape = 's32[1]{0}', space=sflag, size = 0x4, scoped, tag = 'scoped memory for tpu_custom_call.1']
    #allocation4 [shape = 's32[1]{0}', space=sflag, size = 0x4, scoped, tag = 'scoped memory for tpu_custom_call.1']
    #allocation5 [shape = 'u8[8192]{0}', space=vmem, size = 0x2000, scoped, tag = 'input window, operand 1, single buffered']
    #allocation6 [shape = 's32[1]{0}', space=sflag, size = 0x4, scoped, tag = 'scoped memory for tpu_custom_call.1']
    #allocation7 [shape = 'u8[73728]{0}', space=vmem, size = 0x12000, scoped, tag = 'input window, operand 2, single buffered']
    #allocation8 [shape = 'u8[2048]{0}', space=vmem, size = 0x800, scoped, tag = 'output window, operand 0, single buffered']
    #allocation9 [shape = 'u8[2048]{0}', space=vmem, size = 0x800, scoped, tag = 'output window, operand 1, single buffered']
    #allocation10 [shape = 's32[1]{0}', space=sflag, size = 0x4, scoped, tag = 'scoped memory for tpu_custom_call.1']
    %10 = vsyncpa [#allocation3], 0
    %11 = vsyncpa [#allocation6], 0
    %12 = vsyncpa [#allocation4], 0
    %13 = vsyncpa [#allocation10], 0
    // Predicated region
    $region2: #{tpu_custom_call.1} parent=1 // pred_check
      _
    $region3: #{tpu_custom_call.1} parent=1 // pred_check_branch
      %15 = sbr.rel (0) target = $region5
    $region4: #{tpu_custom_call.1} parent=1 // pred_region
      %s17 = ssub.s32 256, 256
      %18 = vsyncadd [#allocation3], %s17
      %s19 = sshll.u32 [#allocation2], 4
      %s20 = int_to_ptr.vmem [resolvable:$true] %s19
      %25 = dma.hbm_to_vmem [thread:$0]  %s0, 256, %s20, [#allocation3], 128, 128, 8
    $region5: #{tpu_custom_call.1} parent=1 // pred_fallthru
      _
    // Predicated region
    $region6: #{tpu_custom_call.1} parent=1 // pred_check
      _
    $region7: #{tpu_custom_call.1} parent=1 // pred_check_branch
      %27 = sbr.rel (0) target = $region9
    $region8: #{tpu_custom_call.1} parent=1 // pred_region
      %s29 = ssub.s32 256, 256
      %30 = vsyncadd [#allocation6], %s29
      %s31 = sshll.u32 [#allocation5], 4
      %s32 = int_to_ptr.vmem [resolvable:$true] %s31
      %37 = dma.hbm_to_vmem [thread:$0]  %s1, 256, %s32, [#allocation6], 128, 128, 8
    $region9: #{tpu_custom_call.1} parent=1 // pred_fallthru
      _
    // Predicated region
    $region10: #{tpu_custom_call.1} parent=1 // pred_check
      _
    $region11: #{tpu_custom_call.1} parent=1 // pred_check_branch
      %39 = sbr.rel (0) target = $region13
    $region12: #{tpu_custom_call.1} parent=1 // pred_region
      %s41 = ssub.s32 2304, 2304
      %42 = vsyncadd [#allocation6], %s41
      %s43 = sshll.u32 [#allocation7], 4
      %s44 = int_to_ptr.vmem [resolvable:$true] %s43
      %49 = dma.hbm_to_vmem [thread:$0]  %s2, 2304, %s44, [#allocation6], 128, 128, 8
    $region13: #{tpu_custom_call.1} parent=1 // pred_fallthru
      _
    // Predicated region
    $region14: #{tpu_custom_call.1} parent=1 // pred_check
      _
    $region15: #{tpu_custom_call.1} parent=1 // pred_check_branch
      %51 = sbr.rel (0) target = $region17
    $region16: #{tpu_custom_call.1} parent=1 // pred_region
      %52 = dma.done [#allocation3], 256
    $region17: #{tpu_custom_call.1} parent=1 // pred_fallthru
      _
    // Predicated region
    $region18: #{tpu_custom_call.1} parent=1 // pred_check
      _
    $region19: #{tpu_custom_call.1} parent=1 // pred_check_branch
      %54 = sbr.rel (0) target = $region21
    $region20: #{tpu_custom_call.1} parent=1 // pred_region
      %55 = dma.done [#allocation6], 256
    $region21: #{tpu_custom_call.1} parent=1 // pred_fallthru
      _
    // Predicated region
    $region22: #{tpu_custom_call.1} parent=1 // pred_check
      _
    $region23: #{tpu_custom_call.1} parent=1 // pred_check_branch
      %57 = sbr.rel (0) target = $region25
    $region24: #{tpu_custom_call.1} parent=1 // pred_region
      %58 = dma.done [#allocation6], 2304
    $region25: #{tpu_custom_call.1} parent=1 // pred_fallthru
      _
    %v59 = vld [vmem:[#allocation7] sm:$0xff]
    %v60 = vld [vmem:[#allocation7 + $0x8] sm:$0xff]
    %v61 = vld [vmem:[#allocation7 + $0x10] sm:$0xff]
    %v62 = vld [vmem:[#allocation7 + $0x18] sm:$0xff]
    %v63 = vld [vmem:[#allocation7 + $0x20] sm:$0xff]
    %v64 = vld [vmem:[#allocation7 + $0x28] sm:$0xff]
    %v65 = vld [vmem:[#allocation7 + $0x30] sm:$0xff]
    %v66 = vld [vmem:[#allocation7 + $0x38] sm:$0xff]
    %v67 = vld [vmem:[#allocation7 + $0x40] sm:$0xff]
    %v68 = vld [vmem:[#allocation7 + $0x48] sm:$0xff]
    %v69 = vld [vmem:[#allocation7 + $0x50] sm:$0xff]
    %v70 = vld [vmem:[#allocation7 + $0x58] sm:$0xff]
    %v71 = vld [vmem:[#allocation7 + $0x60] sm:$0xff]
    %v72 = vld [vmem:[#allocation7 + $0x68] sm:$0xff]
    %v73 = vld [vmem:[#allocation7 + $0x70] sm:$0xff]
    %v74 = vld [vmem:[#allocation7 + $0x78] sm:$0xff]
    %v75 = vld [vmem:[#allocation7 + $0x80] sm:$0xf]
    %v76 = vld [vmem:[#allocation7 + $0x88] sm:$0xff]
    %v77 = vld [vmem:[#allocation2] sm:$0xff]
    %v78 = vld [vmem:[#allocation2 + $0x8] sm:$0xff]
    %v79 = vld [vmem:[#allocation5] sm:$0xff]
    %v80 = vld [vmem:[#allocation5 + $0x8] sm:$0xff]
    %v81 = vlaneseq
    %v82 = vshrl.u32 %v81, 7
    %v83 = vsub.s32 0, %v82
    %v84 = vrot.slane %v76, %v83
    %vm85 = vcmask 261120
    %v87 = vsel %vm85, %v77, 0
    %v90 = vsel %vm85, %v78, 0
    %92 = vmatprep.subr.mxu0 0.0
    %93 = vmatpush1.msra.mxu0 %v59
    %94 = vmatprep.subr.mxu0 0.0
    %95 = vmatpush1.msra.mxu0 %v60
    %96 = vmatprep.subr.mxu0 0.0
    %97 = vmatpush1.msra.mxu0 %v61
    %98 = vmatprep.subr.mxu0 0.0
    %99 = vmatpush1.msra.mxu0 %v62
    %100 = vmatprep.subr.mxu0 0.0
    %101 = vmatpush1.msra.mxu0 0.0
    %102 = vmatprep.subr.mxu0 0.0
    %103 = vmatpush1.msra.mxu0 0.0
    %104 = vmatprep.subr.mxu0 0.0
    %105 = vmatpush1.msra.mxu0 0.0
    %106 = vmatprep.subr.mxu0 0.0
    %107 = vmatpush1.msra.mxu0 0.0
    %108 = vmatprep.subr.mxu0 0.0
    %109 = vmatpush1.msra.mxu0 0.0
    %110 = vmatprep.subr.mxu0 0.0
    %111 = vmatpush1.msra.mxu0 0.0
    %112 = vmatprep.subr.mxu0 0.0
    %113 = vmatpush1.msra.mxu0 0.0
    %114 = vmatprep.subr.mxu0 0.0
    %115 = vmatpush1.msra.mxu0 0.0
    %116 = vmatprep.subr.mxu0 0.0
    %117 = vmatpush1.msra.mxu0 0.0
    %118 = vmatprep.subr.mxu0 0.0
    %119 = vmatpush1.msra.mxu0 0.0
    %120 = vmatprep.subr.mxu0 0.0
    %121 = vmatpush1.msra.mxu0 0.0
    %122 = vmatprep.subr.mxu0 0.0
    %123 = vmatpush1.msra.mxu0 0.0
    %124 = vmatprep.subr.mxu0 0.0
    %125 = vmatpush1.msra.mxu0 0.0
    %126 = vmatprep.subr.mxu0 0.0
    %127 = vmatpush1.msra.mxu0 0.0
    %128 = vmatprep.subr.mxu0 0.0
    %129 = vmatpush1.msra.mxu0 0.0
    %130 = vmatprep.subr.mxu0 0.0
    %131 = vmatpush1.msra.mxu0 0.0
    %132 = vmatprep.subr.mxu0 0.0
    %133 = vmatpush1.msra.mxu0 0.0
    %134 = vmatprep.subr.mxu0 0.0
    %135 = vmatpush1.msra.mxu0 0.0
    %136 = vmatprep.subr.mxu0 0.0
    %137 = vmatpush1.msra.mxu0 0.0
    %138 = vmatprep.subr.mxu0 0.0
    %139 = vmatpush1.msra.mxu0 0.0
    %140 = vmatprep.subr.mxu0 0.0
    %141 = vmatpush1.msra.mxu0 0.0
    %142 = vmatprep.subr.mxu0 0.0
    %143 = vmatpush1.msra.mxu0 0.0
    %144 = vmatprep.subr.mxu0 0.0
    %145 = vmatpush1.msra.mxu0 0.0
    %146 = vmatprep.subr.mxu0 0.0
    %147 = vmatpush1.msra.mxu0 0.0
    %148 = vmatprep.subr.mxu0 0.0
    %149 = vmatpush1.msra.mxu0 0.0
    %150 = vmatprep.subr.mxu0 0.0
    %151 = vmatpush1.msra.mxu0 0.0
    %152 = vmatprep.subr.mxu0 0.0
    %153 = vmatpush1.msra.mxu0 0.0
    %154 = vmatprep.subr.mxu0 0.0
    %155 = vmatpush1.msra.mxu0 0.0
    %156 = vmatprep.mubr.f32.mxu0 0.0
    %157 = vmatmul.mubr.f32.gmra.mrb[0].mxu0 %v87
    %v158 = vpop.f32.mrb[0].mxu0
    %v159 = vadd.f32 %v84, %v158
    %v160 = vpop.f32.mrb[0].mxu0
    %161 = vmatprep.mubr.f32.mxu0 0.0
    %162 = vmatmul.mubr.f32.gmra.mrb[0].mxu0 %v90
    %v163 = vpop.f32.mrb[0].mxu0
    %v164 = vadd.f32 %v84, %v163
    %v165 = vpop.f32.mrb[0].mxu0
    %166 = vdwg.mxu0
    %v167 = vlaneseq
    %v168 = vshrl.u32 %v167, 7
    %v169 = vsub.s32 1, %v168
    %v170 = vrot.slane %v76, %v169
    %v172 = vsel %vm85, %v79, 0
    %v175 = vsel %vm85, %v80, 0
    %177 = vmatprep.subr.mxu0 0.0
    %178 = vmatpush1.msra.mxu0 %v63
    %179 = vmatprep.subr.mxu0 0.0
    %180 = vmatpush1.msra.mxu0 %v64
    %181 = vmatprep.subr.mxu0 0.0
    %182 = vmatpush1.msra.mxu0 %v65
    %183 = vmatprep.subr.mxu0 0.0
    %184 = vmatpush1.msra.mxu0 %v66
    %185 = vmatprep.subr.mxu0 0.0
    %186 = vmatpush1.msra.mxu0 0.0
    %187 = vmatprep.subr.mxu0 0.0
    %188 = vmatpush1.msra.mxu0 0.0
    %189 = vmatprep.subr.mxu0 0.0
    %190 = vmatpush1.msra.mxu0 0.0
    %191 = vmatprep.subr.mxu0 0.0
    %192 = vmatpush1.msra.mxu0 0.0
    %193 = vmatprep.subr.mxu0 0.0
    %194 = vmatpush1.msra.mxu0 0.0
    %195 = vmatprep.subr.mxu0 0.0
    %196 = vmatpush1.msra.mxu0 0.0
    %197 = vmatprep.subr.mxu0 0.0
    %198 = vmatpush1.msra.mxu0 0.0
    %199 = vmatprep.subr.mxu0 0.0
    %200 = vmatpush1.msra.mxu0 0.0
    %201 = vmatprep.subr.mxu0 0.0
    %202 = vmatpush1.msra.mxu0 0.0
    %203 = vmatprep.subr.mxu0 0.0
    %204 = vmatpush1.msra.mxu0 0.0
    %205 = vmatprep.subr.mxu0 0.0
    %206 = vmatpush1.msra.mxu0 0.0
    %207 = vmatprep.subr.mxu0 0.0
    %208 = vmatpush1.msra.mxu0 0.0
    %209 = vmatprep.subr.mxu0 0.0
    %210 = vmatpush1.msra.mxu0 0.0
    %211 = vmatprep.subr.mxu0 0.0
    %212 = vmatpush1.msra.mxu0 0.0
    %213 = vmatprep.subr.mxu0 0.0
    %214 = vmatpush1.msra.mxu0 0.0
    %215 = vmatprep.subr.mxu0 0.0
    %216 = vmatpush1.msra.mxu0 0.0
    %217 = vmatprep.subr.mxu0 0.0
    %218 = vmatpush1.msra.mxu0 0.0
    %219 = vmatprep.subr.mxu0 0.0
    %220 = vmatpush1.msra.mxu0 0.0
    %221 = vmatprep.subr.mxu0 0.0
    %222 = vmatpush1.msra.mxu0 0.0
    %223 = vmatprep.subr.mxu0 0.0
    %224 = vmatpush1.msra.mxu0 0.0
    %225 = vmatprep.subr.mxu0 0.0
    %226 = vmatpush1.msra.mxu0 0.0
    %227 = vmatprep.subr.mxu0 0.0
    %228 = vmatpush1.msra.mxu0 0.0
    %229 = vmatprep.subr.mxu0 0.0
    %230 = vmatpush1.msra.mxu0 0.0
    %231 = vmatprep.subr.mxu0 0.0
    %232 = vmatpush1.msra.mxu0 0.0
    %233 = vmatprep.subr.mxu0 0.0
    %234 = vmatpush1.msra.mxu0 0.0
    %235 = vmatprep.subr.mxu0 0.0
    %236 = vmatpush1.msra.mxu0 0.0
    %237 = vmatprep.subr.mxu0 0.0
    %238 = vmatpush1.msra.mxu0 0.0
    %239 = vmatprep.subr.mxu0 0.0
    %240 = vmatpush1.msra.mxu0 0.0
    %241 = vmatprep.mubr.f32.mxu0 0.0
    %242 = vmatmul.mubr.f32.gmra.mrb[0].mxu0 %v172
    %v243 = vpop.f32.mrb[0].mxu0
    %v244 = vadd.f32 %v170, %v243
    %v245 = vpop.f32.mrb[0].mxu0
    %246 = vmatprep.mubr.f32.mxu0 0.0
    %247 = vmatmul.mubr.f32.gmra.mrb[0].mxu0 %v175
    %v248 = vpop.f32.mrb[0].mxu0
    %v249 = vadd.f32 %v170, %v248
    %v250 = vpop.f32.mrb[0].mxu0
    %251 = vdwg.mxu0
    %v254 = vcombine.high %v159, %v159
    %v256 = vunpack.c.l.s4 1966171168
    %v257 = vunpack.c.0.s8 %v256
    %v258 = vlaneseq
    %v259 = vshrl.u32 %v258, 7
    %v260 = vsub.s32 %v257, %v259
    %v261 = vrot.slane %v159, %v260
    %v263 = vunpack.c.l.s4 1966171168
    %v264 = vunpack.c.0.s8 %v263
    %v265 = vlaneseq
    %v266 = vshrl.u32 %v265, 7
    %v267 = vsub.s32 %v264, %v266
    %v268 = vrot.slane %v254, %v267
    %v269 = vcombine.high %v261, %v261
    %v270 = vcombine.high %v268, %v268
    %v272 = vunpack.c.l.s4 1966171168
    %v273 = vunpack.c.0.s8 %v272
    %v274 = vlaneseq
    %v275 = vshrl.u32 %v274, 7
    %v276 = vsub.s32 %v273, %v275
    %v277 = vrot.slane %v261, %v276
    %v279 = vunpack.c.l.s4 1966171168
    %v280 = vunpack.c.0.s8 %v279
    %v281 = vlaneseq
    %v282 = vshrl.u32 %v281, 7
    %v283 = vsub.s32 %v280, %v282
    %v284 = vrot.slane %v268, %v283
    %v286 = vunpack.c.l.s4 1966171168
    %v287 = vunpack.c.0.s8 %v286
    %v288 = vlaneseq
    %v289 = vshrl.u32 %v288, 7
    %v290 = vsub.s32 %v287, %v289
    %v291 = vrot.slane %v269, %v290
    %v293 = vunpack.c.l.s4 1966171168
    %v294 = vunpack.c.0.s8 %v293
    %v295 = vlaneseq
    %v296 = vshrl.u32 %v295, 7
    %v297 = vsub.s32 %v294, %v296
    %v298 = vrot.slane %v270, %v297
    %v299 = vcombine.high %v277, %v277
    %v300 = vcombine.high %v284, %v284
    %v301 = vcombine.high %v291, %v291
    %v302 = vcombine.high %v298, %v298
    %v303 = vcombine.high %v164, %v164
    %v305 = vunpack.c.l.s4 1966171168
    %v306 = vunpack.c.0.s8 %v305
    %v307 = vlaneseq
    %v308 = vshrl.u32 %v307, 7
    %v309 = vsub.s32 %v306, %v308
    %v310 = vrot.slane %v164, %v309
    %v312 = vunpack.c.l.s4 1966171168
    %v313 = vunpack.c.0.s8 %v312
    %v314 = vlaneseq
    %v315 = vshrl.u32 %v314, 7
    %v316 = vsub.s32 %v313, %v315
    %v317 = vrot.slane %v303, %v316
    %v318 = vcombine.high %v310, %v310
    %v319 = vcombine.high %v317, %v317
    %v321 = vunpack.c.l.s4 1966171168
    %v322 = vunpack.c.0.s8 %v321
    %v323 = vlaneseq
    %v324 = vshrl.u32 %v323, 7
    %v325 = vsub.s32 %v322, %v324
    %v326 = vrot.slane %v310, %v325
    %v328 = vunpack.c.l.s4 1966171168
    %v329 = vunpack.c.0.s8 %v328
    %v330 = vlaneseq
    %v331 = vshrl.u32 %v330, 7
    %v332 = vsub.s32 %v329, %v331
    %v333 = vrot.slane %v317, %v332
    %v335 = vunpack.c.l.s4 1966171168
    %v336 = vunpack.c.0.s8 %v335
    %v337 = vlaneseq
    %v338 = vshrl.u32 %v337, 7
    %v339 = vsub.s32 %v336, %v338
    %v340 = vrot.slane %v318, %v339
    %v342 = vunpack.c.l.s4 1966171168
    %v343 = vunpack.c.0.s8 %v342
    %v344 = vlaneseq
    %v345 = vshrl.u32 %v344, 7
    %v346 = vsub.s32 %v343, %v345
    %v347 = vrot.slane %v319, %v346
    %v348 = vcombine.high %v326, %v326
    %v349 = vcombine.high %v333, %v333
    %v350 = vcombine.high %v340, %v340
    %v351 = vcombine.high %v347, %v347
    %v352 = vlaneseq
    %v353 = vshrl.u32 %v352, 7
    %v354 = vsub.s32 0, %v353
    %v355 = vrot.slane %v277, %v354
    %v356 = vlaneseq
    %v357 = vshrl.u32 %v356, 7
    %v358 = vsub.s32 0, %v357
    %v359 = vrot.slane %v291, %v358
    %v360 = vlaneseq
    %v361 = vshrl.u32 %v360, 7
    %v362 = vsub.s32 0, %v361
    %v363 = vrot.slane %v299, %v362
    %v364 = vlaneseq
    %v365 = vshrl.u32 %v364, 7
    %v366 = vsub.s32 0, %v365
    %v367 = vrot.slane %v301, %v366
    %v368 = vlaneseq
    %v369 = vshrl.u32 %v368, 7
    %v370 = vsub.s32 0, %v369
    %v371 = vrot.slane %v284, %v370
    %v372 = vlaneseq
    %v373 = vshrl.u32 %v372, 7
    %v374 = vsub.s32 0, %v373
    %v375 = vrot.slane %v298, %v374
    %v376 = vlaneseq
    %v377 = vshrl.u32 %v376, 7
    %v378 = vsub.s32 0, %v377
    %v379 = vrot.slane %v300, %v378
    %v380 = vlaneseq
    %v381 = vshrl.u32 %v380, 7
    %v382 = vsub.s32 0, %v381
    %v383 = vrot.slane %v302, %v382
    %v384 = vlaneseq
    %v385 = vshrl.u32 %v384, 7
    %v386 = vsub.s32 0, %v385
    %v387 = vrot.slane %v326, %v386
    %v388 = vlaneseq
    %v389 = vshrl.u32 %v388, 7
    %v390 = vsub.s32 0, %v389
    %v391 = vrot.slane %v340, %v390
    %v392 = vlaneseq
    %v393 = vshrl.u32 %v392, 7
    %v394 = vsub.s32 0, %v393
    %v395 = vrot.slane %v348, %v394
    %v396 = vlaneseq
    %v397 = vshrl.u32 %v396, 7
    %v398 = vsub.s32 0, %v397
    %v399 = vrot.slane %v350, %v398
    %v400 = vlaneseq
    %v401 = vshrl.u32 %v400, 7
    %v402 = vsub.s32 0, %v401
    %v403 = vrot.slane %v333, %v402
    %v404 = vlaneseq
    %v405 = vshrl.u32 %v404, 7
    %v406 = vsub.s32 0, %v405
    %v407 = vrot.slane %v347, %v406
    %v408 = vlaneseq
    %v409 = vshrl.u32 %v408, 7
    %v410 = vsub.s32 0, %v409
    %v411 = vrot.slane %v349, %v410
    %v412 = vlaneseq
    %v413 = vshrl.u32 %v412, 7
    %v414 = vsub.s32 0, %v413
    %v415 = vrot.slane %v351, %v414
    %432 = vrot.lane.b32.xlu0 %v159, 96
    %v433 = vpop.permute.xlu0 %432
    %434 = vrot.lane.b32.xlu0 %v164, 96
    %v435 = vpop.permute.xlu0 %434
    %v438 = vmul.f32 %v355, %v433
    %v439 = vmul.f32 %v359, %v433
    %v440 = vmul.f32 %v363, %v433
    %v441 = vmul.f32 %v367, %v433
    %v442 = vmul.f32 %v371, %v433
    %v443 = vmul.f32 %v375, %v433
    %v444 = vmul.f32 %v379, %v433
    %v445 = vmul.f32 %v383, %v433
    %v446 = vmul.f32 %v387, %v435
    %v447 = vmul.f32 %v391, %v435
    %v448 = vmul.f32 %v395, %v435
    %v449 = vmul.f32 %v399, %v435
    %v450 = vmul.f32 %v403, %v435
    %v451 = vmul.f32 %v407, %v435
    %v452 = vmul.f32 %v411, %v435
    %v453 = vmul.f32 %v415, %v435
    %v455 = vsel %vm85, %v438, 0
    %v458 = vsel %vm85, %v439, 0
    %v461 = vsel %vm85, %v440, 0
    %v464 = vsel %vm85, %v441, 0
    %v467 = vsel %vm85, %v442, 0
    %v470 = vsel %vm85, %v443, 0
    %v473 = vsel %vm85, %v444, 0
    %v476 = vsel %vm85, %v445, 0
    %v479 = vsel %vm85, %v446, 0
    %v482 = vsel %vm85, %v447, 0
    %v485 = vsel %vm85, %v448, 0
    %v488 = vsel %vm85, %v449, 0
    %v491 = vsel %vm85, %v450, 0
    %v494 = vsel %vm85, %v451, 0
    %v497 = vsel %vm85, %v452, 0
    %v500 = vsel %vm85, %v453, 0
    %502 = vmatprep.subr.mxu0 0.0
    %503 = vmatpush1.msra.mxu0 %v71
    %504 = vmatprep.subr.mxu0 0.0
    %505 = vmatpush1.msra.mxu0 %v72
    %506 = vmatprep.subr.mxu0 0.0
    %507 = vmatpush1.msra.mxu0 %v73
    %508 = vmatprep.subr.mxu0 0.0
    %509 = vmatpush1.msra.mxu0 %v74
    %510 = vmatprep.subr.mxu0 0.0
    %511 = vmatpush1.msra.mxu0 0.0
    %512 = vmatprep.subr.mxu0 0.0
    %513 = vmatpush1.msra.mxu0 0.0
    %514 = vmatprep.subr.mxu0 0.0
    %515 = vmatpush1.msra.mxu0 0.0
    %516 = vmatprep.subr.mxu0 0.0
    %517 = vmatpush1.msra.mxu0 0.0
    %518 = vmatprep.subr.mxu0 0.0
    %519 = vmatpush1.msra.mxu0 0.0
    %520 = vmatprep.subr.mxu0 0.0
    %521 = vmatpush1.msra.mxu0 0.0
    %522 = vmatprep.subr.mxu0 0.0
    %523 = vmatpush1.msra.mxu0 0.0
    %524 = vmatprep.subr.mxu0 0.0
    %525 = vmatpush1.msra.mxu0 0.0
    %526 = vmatprep.subr.mxu0 0.0
    %527 = vmatpush1.msra.mxu0 0.0
    %528 = vmatprep.subr.mxu0 0.0
    %529 = vmatpush1.msra.mxu0 0.0
    %530 = vmatprep.subr.mxu0 0.0
    %531 = vmatpush1.msra.mxu0 0.0
    %532 = vmatprep.subr.mxu0 0.0
    %533 = vmatpush1.msra.mxu0 0.0
    %534 = vmatprep.subr.mxu0 0.0
    %535 = vmatpush1.msra.mxu0 0.0
    %536 = vmatprep.subr.mxu0 0.0
    %537 = vmatpush1.msra.mxu0 0.0
    %538 = vmatprep.subr.mxu0 0.0
    %539 = vmatpush1.msra.mxu0 0.0
    %540 = vmatprep.subr.mxu0 0.0
    %541 = vmatpush1.msra.mxu0 0.0
    %542 = vmatprep.subr.mxu0 0.0
    %543 = vmatpush1.msra.mxu0 0.0
    %544 = vmatprep.subr.mxu0 0.0
    %545 = vmatpush1.msra.mxu0 0.0
    %546 = vmatprep.subr.mxu0 0.0
    %547 = vmatpush1.msra.mxu0 0.0
    %548 = vmatprep.subr.mxu0 0.0
    %549 = vmatpush1.msra.mxu0 0.0
    %550 = vmatprep.subr.mxu0 0.0
    %551 = vmatpush1.msra.mxu0 0.0
    %552 = vmatprep.subr.mxu0 0.0
    %553 = vmatpush1.msra.mxu0 0.0
    %554 = vmatprep.subr.mxu0 0.0
    %555 = vmatpush1.msra.mxu0 0.0
    %556 = vmatprep.subr.mxu0 0.0
    %557 = vmatpush1.msra.mxu0 0.0
    %558 = vmatprep.subr.mxu0 0.0
    %559 = vmatpush1.msra.mxu0 0.0
    %560 = vmatprep.subr.mxu0 0.0
    %561 = vmatpush1.msra.mxu0 0.0
    %562 = vmatprep.subr.mxu0 0.0
    %563 = vmatpush1.msra.mxu0 0.0
    %564 = vmatprep.subr.mxu0 0.0
    %565 = vmatpush1.msra.mxu0 0.0
    %566 = vmatprep.mubr.f32.mxu0 0.0
    %567 = vmatmul.mubr.f32.gmra.mrb[0].mxu0 %v455
    %v568 = vpop.f32.mrb[0].mxu0
    %v569 = vadd.f32 0.0, %v568
    %v570 = vpop.f32.mrb[0].mxu0
    %571 = vmatprep.mubr.f32.mxu0 0.0
    %572 = vmatmul.mubr.f32.gmra.mrb[0].mxu0 %v458
    %v573 = vpop.f32.mrb[0].mxu0
    %v574 = vadd.f32 0.0, %v573
    %v575 = vpop.f32.mrb[0].mxu0
    %576 = vmatprep.mubr.f32.mxu0 0.0
    %577 = vmatmul.mubr.f32.gmra.mrb[0].mxu0 %v461
    %v578 = vpop.f32.mrb[0].mxu0
    %v579 = vadd.f32 0.0, %v578
    %v580 = vpop.f32.mrb[0].mxu0
    %581 = vmatprep.mubr.f32.mxu0 0.0
    %582 = vmatmul.mubr.f32.gmra.mrb[0].mxu0 %v464
    %v583 = vpop.f32.mrb[0].mxu0
    %v584 = vadd.f32 0.0, %v583
    %v585 = vpop.f32.mrb[0].mxu0
    %586 = vmatprep.mubr.f32.mxu0 0.0
    %587 = vmatmul.mubr.f32.gmra.mrb[0].mxu0 %v467
    %v588 = vpop.f32.mrb[0].mxu0
    %v589 = vadd.f32 0.0, %v588
    %v590 = vpop.f32.mrb[0].mxu0
    %591 = vmatprep.mubr.f32.mxu0 0.0
    %592 = vmatmul.mubr.f32.gmra.mrb[0].mxu0 %v470
    %v593 = vpop.f32.mrb[0].mxu0
    %v594 = vadd.f32 0.0, %v593
    %v595 = vpop.f32.mrb[0].mxu0
    %596 = vmatprep.mubr.f32.mxu0 0.0
    %597 = vmatmul.mubr.f32.gmra.mrb[0].mxu0 %v473
    %v598 = vpop.f32.mrb[0].mxu0
    %v599 = vadd.f32 0.0, %v598
    %v600 = vpop.f32.mrb[0].mxu0
    %601 = vmatprep.mubr.f32.mxu0 0.0
    %602 = vmatmul.mubr.f32.gmra.mrb[0].mxu0 %v476
    %v603 = vpop.f32.mrb[0].mxu0
    %v604 = vadd.f32 0.0, %v603
    %v605 = vpop.f32.mrb[0].mxu0
    %606 = vmatprep.mubr.f32.mxu0 0.0
    %607 = vmatmul.mubr.f32.gmra.mrb[0].mxu0 %v479
    %v608 = vpop.f32.mrb[0].mxu0
    %v609 = vadd.f32 0.0, %v608
    %v610 = vpop.f32.mrb[0].mxu0
    %611 = vmatprep.mubr.f32.mxu0 0.0
    %612 = vmatmul.mubr.f32.gmra.mrb[0].mxu0 %v482
    %v613 = vpop.f32.mrb[0].mxu0
    %v614 = vadd.f32 0.0, %v613
    %v615 = vpop.f32.mrb[0].mxu0
    %616 = vmatprep.mubr.f32.mxu0 0.0
    %617 = vmatmul.mubr.f32.gmra.mrb[0].mxu0 %v485
    %v618 = vpop.f32.mrb[0].mxu0
    %v619 = vadd.f32 0.0, %v618
    %v620 = vpop.f32.mrb[0].mxu0
    %621 = vmatprep.mubr.f32.mxu0 0.0
    %622 = vmatmul.mubr.f32.gmra.mrb[0].mxu0 %v488
    %v623 = vpop.f32.mrb[0].mxu0
    %v624 = vadd.f32 0.0, %v623
    %v625 = vpop.f32.mrb[0].mxu0
    %626 = vmatprep.mubr.f32.mxu0 0.0
    %627 = vmatmul.mubr.f32.gmra.mrb[0].mxu0 %v491
    %v628 = vpop.f32.mrb[0].mxu0
    %v629 = vadd.f32 0.0, %v628
    %v630 = vpop.f32.mrb[0].mxu0
    %631 = vmatprep.mubr.f32.mxu0 0.0
    %632 = vmatmul.mubr.f32.gmra.mrb[0].mxu0 %v494
    %v633 = vpop.f32.mrb[0].mxu0
    %v634 = vadd.f32 0.0, %v633
    %v635 = vpop.f32.mrb[0].mxu0
    %636 = vmatprep.mubr.f32.mxu0 0.0
    %637 = vmatmul.mubr.f32.gmra.mrb[0].mxu0 %v497
    %v638 = vpop.f32.mrb[0].mxu0
    %v639 = vadd.f32 0.0, %v638
    %v640 = vpop.f32.mrb[0].mxu0
    %641 = vmatprep.mubr.f32.mxu0 0.0
    %642 = vmatmul.mubr.f32.gmra.mrb[0].mxu0 %v500
    %v643 = vpop.f32.mrb[0].mxu0
    %v644 = vadd.f32 0.0, %v643
    %v645 = vpop.f32.mrb[0].mxu0
    %646 = vdwg.mxu0
    %vm647 = vcmask 31744
    %v648 = vsel %vm647, %v569, -inf
    %v649 = vrot.slane %v648, 4
    %v650 = vmax.f32 %v648, %v649
    %v651 = vrot.slane %v650, 2
    %v652 = vmax.f32 %v650, %v651
    %v653 = vrot.slane %v652, 1
    %v654 = vmax.f32 %v652, %v653
    %v655 = vsel %vm647, %v574, -inf
    %v656 = vrot.slane %v655, 4
    %v657 = vmax.f32 %v655, %v656
    %v658 = vrot.slane %v657, 2
    %v659 = vmax.f32 %v657, %v658
    %v660 = vrot.slane %v659, 1
    %v661 = vmax.f32 %v659, %v660
    %v662 = vsel %vm647, %v579, -inf
    %v663 = vrot.slane %v662, 4
    %v664 = vmax.f32 %v662, %v663
    %v665 = vrot.slane %v664, 2
    %v666 = vmax.f32 %v664, %v665
    %v667 = vrot.slane %v666, 1
    %v668 = vmax.f32 %v666, %v667
    %v669 = vsel %vm647, %v584, -inf
    %v670 = vrot.slane %v669, 4
    %v671 = vmax.f32 %v669, %v670
    %v672 = vrot.slane %v671, 2
    %v673 = vmax.f32 %v671, %v672
    %v674 = vrot.slane %v673, 1
    %v675 = vmax.f32 %v673, %v674
    %v676 = vsel %vm647, %v589, -inf
    %v677 = vrot.slane %v676, 4
    %v678 = vmax.f32 %v676, %v677
    %v679 = vrot.slane %v678, 2
    %v680 = vmax.f32 %v678, %v679
    %v681 = vrot.slane %v680, 1
    %v682 = vmax.f32 %v680, %v681
    %v683 = vsel %vm647, %v594, -inf
    %v684 = vrot.slane %v683, 4
    %v685 = vmax.f32 %v683, %v684
    %v686 = vrot.slane %v685, 2
    %v687 = vmax.f32 %v685, %v686
    %v688 = vrot.slane %v687, 1
    %v689 = vmax.f32 %v687, %v688
    %v690 = vsel %vm647, %v599, -inf
    %v691 = vrot.slane %v690, 4
    %v692 = vmax.f32 %v690, %v691
    %v693 = vrot.slane %v692, 2
    %v694 = vmax.f32 %v692, %v693
    %v695 = vrot.slane %v694, 1
    %v696 = vmax.f32 %v694, %v695
    %v697 = vsel %vm647, %v604, -inf
    %v698 = vrot.slane %v697, 4
    %v699 = vmax.f32 %v697, %v698
    %v700 = vrot.slane %v699, 2
    %v701 = vmax.f32 %v699, %v700
    %v702 = vrot.slane %v701, 1
    %v703 = vmax.f32 %v701, %v702
    %v704 = vsel %vm647, %v609, -inf
    %v705 = vrot.slane %v704, 4
    %v706 = vmax.f32 %v704, %v705
    %v707 = vrot.slane %v706, 2
    %v708 = vmax.f32 %v706, %v707
    %v709 = vrot.slane %v708, 1
    %v710 = vmax.f32 %v708, %v709
    %v711 = vsel %vm647, %v614, -inf
    %v712 = vrot.slane %v711, 4
    %v713 = vmax.f32 %v711, %v712
    %v714 = vrot.slane %v713, 2
    %v715 = vmax.f32 %v713, %v714
    %v716 = vrot.slane %v715, 1
    %v717 = vmax.f32 %v715, %v716
    %v718 = vsel %vm647, %v619, -inf
    %v719 = vrot.slane %v718, 4
    %v720 = vmax.f32 %v718, %v719
    %v721 = vrot.slane %v720, 2
    %v722 = vmax.f32 %v720, %v721
    %v723 = vrot.slane %v722, 1
    %v724 = vmax.f32 %v722, %v723
    %v725 = vsel %vm647, %v624, -inf
    %v726 = vrot.slane %v725, 4
    %v727 = vmax.f32 %v725, %v726
    %v728 = vrot.slane %v727, 2
    %v729 = vmax.f32 %v727, %v728
    %v730 = vrot.slane %v729, 1
    %v731 = vmax.f32 %v729, %v730
    %v732 = vsel %vm647, %v629, -inf
    %v733 = vrot.slane %v732, 4
    %v734 = vmax.f32 %v732, %v733
    %v735 = vrot.slane %v734, 2
    %v736 = vmax.f32 %v734, %v735
    %v737 = vrot.slane %v736, 1
    %v738 = vmax.f32 %v736, %v737
    %v739 = vsel %vm647, %v634, -inf
    %v740 = vrot.slane %v739, 4
    %v741 = vmax.f32 %v739, %v740
    %v742 = vrot.slane %v741, 2
    %v743 = vmax.f32 %v741, %v742
    %v744 = vrot.slane %v743, 1
    %v745 = vmax.f32 %v743, %v744
    %v746 = vsel %vm647, %v639, -inf
    %v747 = vrot.slane %v746, 4
    %v748 = vmax.f32 %v746, %v747
    %v749 = vrot.slane %v748, 2
    %v750 = vmax.f32 %v748, %v749
    %v751 = vrot.slane %v750, 1
    %v752 = vmax.f32 %v750, %v751
    %v753 = vsel %vm647, %v644, -inf
    %v754 = vrot.slane %v753, 4
    %v755 = vmax.f32 %v753, %v754
    %v756 = vrot.slane %v755, 2
    %v757 = vmax.f32 %v755, %v756
    %v758 = vrot.slane %v757, 1
    %v759 = vmax.f32 %v757, %v758
    %v760 = vsub.f32 %v569, %v654
    %v761 = vsub.f32 %v574, %v661
    %v762 = vsub.f32 %v579, %v668
    %v763 = vsub.f32 %v584, %v675
    %v764 = vsub.f32 %v589, %v682
    %v765 = vsub.f32 %v594, %v689
    %v766 = vsub.f32 %v599, %v696
    %v767 = vsub.f32 %v604, %v703
    %v768 = vsub.f32 %v609, %v710
    %v769 = vsub.f32 %v614, %v717
    %v770 = vsub.f32 %v619, %v724
    %v771 = vsub.f32 %v624, %v731
    %v772 = vsub.f32 %v629, %v738
    %v773 = vsub.f32 %v634, %v745
    %v774 = vsub.f32 %v639, %v752
    %v775 = vsub.f32 %v644, %v759
    %v776 = vmul.f32 %v760, 1.442695
    %v777 = vpow.pop %v776
    %v778 = vmul.f32 %v761, 1.442695
    %v779 = vpow.pop %v778
    %v780 = vmul.f32 %v762, 1.442695
    %v781 = vpow.pop %v780
    %v782 = vmul.f32 %v763, 1.442695
    %v783 = vpow.pop %v782
    %v784 = vmul.f32 %v764, 1.442695
    %v785 = vpow.pop %v784
    %v786 = vmul.f32 %v765, 1.442695
    %v787 = vpow.pop %v786
    %v788 = vmul.f32 %v766, 1.442695
    %v789 = vpow.pop %v788
    %v790 = vmul.f32 %v767, 1.442695
    %v791 = vpow.pop %v790
    %v792 = vmul.f32 %v768, 1.442695
    %v793 = vpow.pop %v792
    %v794 = vmul.f32 %v769, 1.442695
    %v795 = vpow.pop %v794
    %v796 = vmul.f32 %v770, 1.442695
    %v797 = vpow.pop %v796
    %v798 = vmul.f32 %v771, 1.442695
    %v799 = vpow.pop %v798
    %v800 = vmul.f32 %v772, 1.442695
    %v801 = vpow.pop %v800
    %v802 = vmul.f32 %v773, 1.442695
    %v803 = vpow.pop %v802
    %v804 = vmul.f32 %v774, 1.442695
    %v805 = vpow.pop %v804
    %v806 = vmul.f32 %v775, 1.442695
    %v807 = vpow.pop %v806
    %v808 = vsel %vm647, %v777, 0.0
    %v809 = vrot.slane %v808, 4
    %v810 = vadd.f32 %v808, %v809
    %v811 = vrot.slane %v810, 2
    %v812 = vadd.f32 %v810, %v811
    %v813 = vrot.slane %v812, 1
    %v814 = vadd.f32 %v812, %v813
    %v815 = vsel %vm647, %v779, 0.0
    %v816 = vrot.slane %v815, 4
    %v817 = vadd.f32 %v815, %v816
    %v818 = vrot.slane %v817, 2
    %v819 = vadd.f32 %v817, %v818
    %v820 = vrot.slane %v819, 1
    %v821 = vadd.f32 %v819, %v820
    %v822 = vsel %vm647, %v781, 0.0
    %v823 = vrot.slane %v822, 4
    %v824 = vadd.f32 %v822, %v823
    %v825 = vrot.slane %v824, 2
    %v826 = vadd.f32 %v824, %v825
    %v827 = vrot.slane %v826, 1
    %v828 = vadd.f32 %v826, %v827
    %v829 = vsel %vm647, %v783, 0.0
    %v830 = vrot.slane %v829, 4
    %v831 = vadd.f32 %v829, %v830
    %v832 = vrot.slane %v831, 2
    %v833 = vadd.f32 %v831, %v832
    %v834 = vrot.slane %v833, 1
    %v835 = vadd.f32 %v833, %v834
    %v836 = vsel %vm647, %v785, 0.0
    %v837 = vrot.slane %v836, 4
    %v838 = vadd.f32 %v836, %v837
    %v839 = vrot.slane %v838, 2
    %v840 = vadd.f32 %v838, %v839
    %v841 = vrot.slane %v840, 1
    %v842 = vadd.f32 %v840, %v841
    %v843 = vsel %vm647, %v787, 0.0
    %v844 = vrot.slane %v843, 4
    %v845 = vadd.f32 %v843, %v844
    %v846 = vrot.slane %v845, 2
    %v847 = vadd.f32 %v845, %v846
    %v848 = vrot.slane %v847, 1
    %v849 = vadd.f32 %v847, %v848
    %v850 = vsel %vm647, %v789, 0.0
    %v851 = vrot.slane %v850, 4
    %v852 = vadd.f32 %v850, %v851
    %v853 = vrot.slane %v852, 2
    %v854 = vadd.f32 %v852, %v853
    %v855 = vrot.slane %v854, 1
    %v856 = vadd.f32 %v854, %v855
    %v857 = vsel %vm647, %v791, 0.0
    %v858 = vrot.slane %v857, 4
    %v859 = vadd.f32 %v857, %v858
    %v860 = vrot.slane %v859, 2
    %v861 = vadd.f32 %v859, %v860
    %v862 = vrot.slane %v861, 1
    %v863 = vadd.f32 %v861, %v862
    %v864 = vsel %vm647, %v793, 0.0
    %v865 = vrot.slane %v864, 4
    %v866 = vadd.f32 %v864, %v865
    %v867 = vrot.slane %v866, 2
    %v868 = vadd.f32 %v866, %v867
    %v869 = vrot.slane %v868, 1
    %v870 = vadd.f32 %v868, %v869
    %v871 = vsel %vm647, %v795, 0.0
    %v872 = vrot.slane %v871, 4
    %v873 = vadd.f32 %v871, %v872
    %v874 = vrot.slane %v873, 2
    %v875 = vadd.f32 %v873, %v874
    %v876 = vrot.slane %v875, 1
    %v877 = vadd.f32 %v875, %v876
    %v878 = vsel %vm647, %v797, 0.0
    %v879 = vrot.slane %v878, 4
    %v880 = vadd.f32 %v878, %v879
    %v881 = vrot.slane %v880, 2
    %v882 = vadd.f32 %v880, %v881
    %v883 = vrot.slane %v882, 1
    %v884 = vadd.f32 %v882, %v883
    %v885 = vsel %vm647, %v799, 0.0
    %v886 = vrot.slane %v885, 4
    %v887 = vadd.f32 %v885, %v886
    %v888 = vrot.slane %v887, 2
    %v889 = vadd.f32 %v887, %v888
    %v890 = vrot.slane %v889, 1
    %v891 = vadd.f32 %v889, %v890
    %v892 = vsel %vm647, %v801, 0.0
    %v893 = vrot.slane %v892, 4
    %v894 = vadd.f32 %v892, %v893
    %v895 = vrot.slane %v894, 2
    %v896 = vadd.f32 %v894, %v895
    %v897 = vrot.slane %v896, 1
    %v898 = vadd.f32 %v896, %v897
    %v899 = vsel %vm647, %v803, 0.0
    %v900 = vrot.slane %v899, 4
    %v901 = vadd.f32 %v899, %v900
    %v902 = vrot.slane %v901, 2
    %v903 = vadd.f32 %v901, %v902
    %v904 = vrot.slane %v903, 1
    %v905 = vadd.f32 %v903, %v904
    %v906 = vsel %vm647, %v805, 0.0
    %v907 = vrot.slane %v906, 4
    %v908 = vadd.f32 %v906, %v907
    %v909 = vrot.slane %v908, 2
    %v910 = vadd.f32 %v908, %v909
    %v911 = vrot.slane %v910, 1
    %v912 = vadd.f32 %v910, %v911
    %v913 = vsel %vm647, %v807, 0.0
    %v914 = vrot.slane %v913, 4
    %v915 = vadd.f32 %v913, %v914
    %v916 = vrot.slane %v915, 2
    %v917 = vadd.f32 %v915, %v916
    %v918 = vrot.slane %v917, 1
    %v919 = vadd.f32 %v917, %v918
    %v920 = vrcp.pop %v814
    %v921 = vmul.f32 %v777, %v920
    %v922 = vrcp.pop %v821
    %v923 = vmul.f32 %v779, %v922
    %v924 = vrcp.pop %v828
    %v925 = vmul.f32 %v781, %v924
    %v926 = vrcp.pop %v835
    %v927 = vmul.f32 %v783, %v926
    %v928 = vrcp.pop %v842
    %v929 = vmul.f32 %v785, %v928
    %v930 = vrcp.pop %v849
    %v931 = vmul.f32 %v787, %v930
    %v932 = vrcp.pop %v856
    %v933 = vmul.f32 %v789, %v932
    %v934 = vrcp.pop %v863
    %v935 = vmul.f32 %v791, %v934
    %v936 = vrcp.pop %v870
    %v937 = vmul.f32 %v793, %v936
    %v938 = vrcp.pop %v877
    %v939 = vmul.f32 %v795, %v938
    %v940 = vrcp.pop %v884
    %v941 = vmul.f32 %v797, %v940
    %v942 = vrcp.pop %v891
    %v943 = vmul.f32 %v799, %v942
    %v944 = vrcp.pop %v898
    %v945 = vmul.f32 %v801, %v944
    %v946 = vrcp.pop %v905
    %v947 = vmul.f32 %v803, %v946
    %v948 = vrcp.pop %v912
    %v949 = vmul.f32 %v805, %v948
    %v950 = vrcp.pop %v919
    %v951 = vmul.f32 %v807, %v950
    %v953 = vsel %vm647, %v921, 0
    %v956 = vsel %vm647, %v923, 0
    %v959 = vsel %vm647, %v925, 0
    %v962 = vsel %vm647, %v927, 0
    %v965 = vsel %vm647, %v929, 0
    %v968 = vsel %vm647, %v931, 0
    %v971 = vsel %vm647, %v933, 0
    %v974 = vsel %vm647, %v935, 0
    %v977 = vsel %vm647, %v937, 0
    %v980 = vsel %vm647, %v939, 0
    %v983 = vsel %vm647, %v941, 0
    %v986 = vsel %vm647, %v943, 0
    %v989 = vsel %vm647, %v945, 0
    %v992 = vsel %vm647, %v947, 0
    %v995 = vsel %vm647, %v949, 0
    %v998 = vsel %vm647, %v951, 0
    %vm1000 = vcmask 1043456
    %v1002 = vsel %vm1000, %v75, 0
    %1004 = vmatprep.subr.mxu0 0.0
    %1005 = vmatpush1.msra.mxu0 %v1002
    %1006 = vmatprep.subr.mxu0 0.0
    %1007 = vmatpush1.msra.mxu0 0.0
    %1008 = vmatprep.subr.mxu0 0.0
    %1009 = vmatpush1.msra.mxu0 0.0
    %1010 = vmatprep.subr.mxu0 0.0
    %1011 = vmatpush1.msra.mxu0 0.0
    %1012 = vmatprep.subr.mxu0 0.0
    %1013 = vmatpush1.msra.mxu0 0.0
    %1014 = vmatprep.subr.mxu0 0.0
    %1015 = vmatpush1.msra.mxu0 0.0
    %1016 = vmatprep.subr.mxu0 0.0
    %1017 = vmatpush1.msra.mxu0 0.0
    %1018 = vmatprep.subr.mxu0 0.0
    %1019 = vmatpush1.msra.mxu0 0.0
    %1020 = vmatprep.subr.mxu0 0.0
    %1021 = vmatpush1.msra.mxu0 0.0
    %1022 = vmatprep.subr.mxu0 0.0
    %1023 = vmatpush1.msra.mxu0 0.0
    %1024 = vmatprep.subr.mxu0 0.0
    %1025 = vmatpush1.msra.mxu0 0.0
    %1026 = vmatprep.subr.mxu0 0.0
    %1027 = vmatpush1.msra.mxu0 0.0
    %1028 = vmatprep.subr.mxu0 0.0
    %1029 = vmatpush1.msra.mxu0 0.0
    %1030 = vmatprep.subr.mxu0 0.0
    %1031 = vmatpush1.msra.mxu0 0.0
    %1032 = vmatprep.subr.mxu0 0.0
    %1033 = vmatpush1.msra.mxu0 0.0
    %1034 = vmatprep.subr.mxu0 0.0
    %1035 = vmatpush1.msra.mxu0 0.0
    %1036 = vmatprep.subr.mxu0 0.0
    %1037 = vmatpush1.msra.mxu0 0.0
    %1038 = vmatprep.subr.mxu0 0.0
    %1039 = vmatpush1.msra.mxu0 0.0
    %1040 = vmatprep.subr.mxu0 0.0
    %1041 = vmatpush1.msra.mxu0 0.0
    %1042 = vmatprep.subr.mxu0 0.0
    %1043 = vmatpush1.msra.mxu0 0.0
    %1044 = vmatprep.subr.mxu0 0.0
    %1045 = vmatpush1.msra.mxu0 0.0
    %1046 = vmatprep.subr.mxu0 0.0
    %1047 = vmatpush1.msra.mxu0 0.0
    %1048 = vmatprep.subr.mxu0 0.0
    %1049 = vmatpush1.msra.mxu0 0.0
    %1050 = vmatprep.subr.mxu0 0.0
    %1051 = vmatpush1.msra.mxu0 0.0
    %1052 = vmatprep.subr.mxu0 0.0
    %1053 = vmatpush1.msra.mxu0 0.0
    %1054 = vmatprep.subr.mxu0 0.0
    %1055 = vmatpush1.msra.mxu0 0.0
    %1056 = vmatprep.subr.mxu0 0.0
    %1057 = vmatpush1.msra.mxu0 0.0
    %1058 = vmatprep.subr.mxu0 0.0
    %1059 = vmatpush1.msra.mxu0 0.0
    %1060 = vmatprep.subr.mxu0 0.0
    %1061 = vmatpush1.msra.mxu0 0.0
    %1062 = vmatprep.subr.mxu0 0.0
    %1063 = vmatpush1.msra.mxu0 0.0
    %1064 = vmatprep.subr.mxu0 0.0
    %1065 = vmatpush1.msra.mxu0 0.0
    %1066 = vmatprep.subr.mxu0 0.0
    %1067 = vmatpush1.msra.mxu0 0.0
    %1068 = vmatprep.mubr.f32.mxu0 0.0
    %1069 = vmatmul.mubr.f32.gmra.mrb[0].mxu0 %v953
    %v1070 = vpop.f32.mrb[0].mxu0
    %v1071 = vadd.f32 0.0, %v1070
    %v1072 = vpop.f32.mrb[0].mxu0
    %1073 = vmatprep.mubr.f32.mxu0 0.0
    %1074 = vmatmul.mubr.f32.gmra.mrb[0].mxu0 %v956
    %v1075 = vpop.f32.mrb[0].mxu0
    %v1076 = vadd.f32 0.0, %v1075
    %v1077 = vpop.f32.mrb[0].mxu0
    %1078 = vmatprep.mubr.f32.mxu0 0.0
    %1079 = vmatmul.mubr.f32.gmra.mrb[0].mxu0 %v959
    %v1080 = vpop.f32.mrb[0].mxu0
    %v1081 = vadd.f32 0.0, %v1080
    %v1082 = vpop.f32.mrb[0].mxu0
    %1083 = vmatprep.mubr.f32.mxu0 0.0
    %1084 = vmatmul.mubr.f32.gmra.mrb[0].mxu0 %v962
    %v1085 = vpop.f32.mrb[0].mxu0
    %v1086 = vadd.f32 0.0, %v1085
    %v1087 = vpop.f32.mrb[0].mxu0
    %1088 = vmatprep.mubr.f32.mxu0 0.0
    %1089 = vmatmul.mubr.f32.gmra.mrb[0].mxu0 %v965
    %v1090 = vpop.f32.mrb[0].mxu0
    %v1091 = vadd.f32 0.0, %v1090
    %v1092 = vpop.f32.mrb[0].mxu0
    %1093 = vmatprep.mubr.f32.mxu0 0.0
    %1094 = vmatmul.mubr.f32.gmra.mrb[0].mxu0 %v968
    %v1095 = vpop.f32.mrb[0].mxu0
    %v1096 = vadd.f32 0.0, %v1095
    %v1097 = vpop.f32.mrb[0].mxu0
    %1098 = vmatprep.mubr.f32.mxu0 0.0
    %1099 = vmatmul.mubr.f32.gmra.mrb[0].mxu0 %v971
    %v1100 = vpop.f32.mrb[0].mxu0
    %v1101 = vadd.f32 0.0, %v1100
    %v1102 = vpop.f32.mrb[0].mxu0
    %1103 = vmatprep.mubr.f32.mxu0 0.0
    %1104 = vmatmul.mubr.f32.gmra.mrb[0].mxu0 %v974
    %v1105 = vpop.f32.mrb[0].mxu0
    %v1106 = vadd.f32 0.0, %v1105
    %v1107 = vpop.f32.mrb[0].mxu0
    %1108 = vmatprep.mubr.f32.mxu0 0.0
    %1109 = vmatmul.mubr.f32.gmra.mrb[0].mxu0 %v977
    %v1110 = vpop.f32.mrb[0].mxu0
    %v1111 = vadd.f32 0.0, %v1110
    %v1112 = vpop.f32.mrb[0].mxu0
    %1113 = vmatprep.mubr.f32.mxu0 0.0
    %1114 = vmatmul.mubr.f32.gmra.mrb[0].mxu0 %v980
    %v1115 = vpop.f32.mrb[0].mxu0
    %v1116 = vadd.f32 0.0, %v1115
    %v1117 = vpop.f32.mrb[0].mxu0
    %1118 = vmatprep.mubr.f32.mxu0 0.0
    %1119 = vmatmul.mubr.f32.gmra.mrb[0].mxu0 %v983
    %v1120 = vpop.f32.mrb[0].mxu0
    %v1121 = vadd.f32 0.0, %v1120
    %v1122 = vpop.f32.mrb[0].mxu0
    %1123 = vmatprep.mubr.f32.mxu0 0.0
    %1124 = vmatmul.mubr.f32.gmra.mrb[0].mxu0 %v986
    %v1125 = vpop.f32.mrb[0].mxu0
    %v1126 = vadd.f32 0.0, %v1125
    %v1127 = vpop.f32.mrb[0].mxu0
    %1128 = vmatprep.mubr.f32.mxu0 0.0
    %1129 = vmatmul.mubr.f32.gmra.mrb[0].mxu0 %v989
    %v1130 = vpop.f32.mrb[0].mxu0
    %v1131 = vadd.f32 0.0, %v1130
    %v1132 = vpop.f32.mrb[0].mxu0
    %1133 = vmatprep.mubr.f32.mxu0 0.0
    %1134 = vmatmul.mubr.f32.gmra.mrb[0].mxu0 %v992
    %v1135 = vpop.f32.mrb[0].mxu0
    %v1136 = vadd.f32 0.0, %v1135
    %v1137 = vpop.f32.mrb[0].mxu0
    %1138 = vmatprep.mubr.f32.mxu0 0.0
    %1139 = vmatmul.mubr.f32.gmra.mrb[0].mxu0 %v995
    %v1140 = vpop.f32.mrb[0].mxu0
    %v1141 = vadd.f32 0.0, %v1140
    %v1142 = vpop.f32.mrb[0].mxu0
    %1143 = vmatprep.mubr.f32.mxu0 0.0
    %1144 = vmatmul.mubr.f32.gmra.mrb[0].mxu0 %v998
    %v1145 = vpop.f32.mrb[0].mxu0
    %v1146 = vadd.f32 0.0, %v1145
    %v1147 = vpop.f32.mrb[0].mxu0
    %1148 = vdwg.mxu0
    %v1149 = vmul.f32 %v1071, %v244
    %v1150 = vmul.f32 %v1076, %v244
    %v1151 = vmul.f32 %v1081, %v244
    %v1152 = vmul.f32 %v1086, %v244
    %v1153 = vmul.f32 %v1091, %v244
    %v1154 = vmul.f32 %v1096, %v244
    %v1155 = vmul.f32 %v1101, %v244
    %v1156 = vmul.f32 %v1106, %v244
    %v1157 = vmul.f32 %v1111, %v249
    %v1158 = vmul.f32 %v1116, %v249
    %v1159 = vmul.f32 %v1121, %v249
    %v1160 = vmul.f32 %v1126, %v249
    %v1161 = vmul.f32 %v1131, %v249
    %v1162 = vmul.f32 %v1136, %v249
    %v1163 = vmul.f32 %v1141, %v249
    %v1164 = vmul.f32 %v1146, %v249
    %v1165 = vsel %vm85, %v1149, 0.0
    %v1166 = vrot.slane %v1165, 4
    %v1167 = vadd.f32 %v1165, %v1166
    %v1168 = vrot.slane %v1167, 2
    %v1169 = vadd.f32 %v1167, %v1168
    %v1170 = vrot.slane %v1169, 1
    %v1171 = vadd.f32 %v1169, %v1170
    %v1172 = vsel %vm85, %v1150, 0.0
    %v1173 = vrot.slane %v1172, 4
    %v1174 = vadd.f32 %v1172, %v1173
    %v1175 = vrot.slane %v1174, 2
    %v1176 = vadd.f32 %v1174, %v1175
    %v1177 = vrot.slane %v1176, 1
    %v1178 = vadd.f32 %v1176, %v1177
    %v1179 = vsel %vm85, %v1151, 0.0
    %v1180 = vrot.slane %v1179, 4
    %v1181 = vadd.f32 %v1179, %v1180
    %v1182 = vrot.slane %v1181, 2
    %v1183 = vadd.f32 %v1181, %v1182
    %v1184 = vrot.slane %v1183, 1
    %v1185 = vadd.f32 %v1183, %v1184
    %v1186 = vsel %vm85, %v1152, 0.0
    %v1187 = vrot.slane %v1186, 4
    %v1188 = vadd.f32 %v1186, %v1187
    %v1189 = vrot.slane %v1188, 2
    %v1190 = vadd.f32 %v1188, %v1189
    %v1191 = vrot.slane %v1190, 1
    %v1192 = vadd.f32 %v1190, %v1191
    %v1193 = vsel %vm85, %v1153, 0.0
    %v1194 = vrot.slane %v1193, 4
    %v1195 = vadd.f32 %v1193, %v1194
    %v1196 = vrot.slane %v1195, 2
    %v1197 = vadd.f32 %v1195, %v1196
    %v1198 = vrot.slane %v1197, 1
    %v1199 = vadd.f32 %v1197, %v1198
    %v1200 = vsel %vm85, %v1154, 0.0
    %v1201 = vrot.slane %v1200, 4
    %v1202 = vadd.f32 %v1200, %v1201
    %v1203 = vrot.slane %v1202, 2
    %v1204 = vadd.f32 %v1202, %v1203
    %v1205 = vrot.slane %v1204, 1
    %v1206 = vadd.f32 %v1204, %v1205
    %v1207 = vsel %vm85, %v1155, 0.0
    %v1208 = vrot.slane %v1207, 4
    %v1209 = vadd.f32 %v1207, %v1208
    %v1210 = vrot.slane %v1209, 2
    %v1211 = vadd.f32 %v1209, %v1210
    %v1212 = vrot.slane %v1211, 1
    %v1213 = vadd.f32 %v1211, %v1212
    %v1214 = vsel %vm85, %v1156, 0.0
    %v1215 = vrot.slane %v1214, 4
    %v1216 = vadd.f32 %v1214, %v1215
    %v1217 = vrot.slane %v1216, 2
    %v1218 = vadd.f32 %v1216, %v1217
    %v1219 = vrot.slane %v1218, 1
    %v1220 = vadd.f32 %v1218, %v1219
    %v1221 = vsel %vm85, %v1157, 0.0
    %v1222 = vrot.slane %v1221, 4
    %v1223 = vadd.f32 %v1221, %v1222
    %v1224 = vrot.slane %v1223, 2
    %v1225 = vadd.f32 %v1223, %v1224
    %v1226 = vrot.slane %v1225, 1
    %v1227 = vadd.f32 %v1225, %v1226
    %v1228 = vsel %vm85, %v1158, 0.0
    %v1229 = vrot.slane %v1228, 4
    %v1230 = vadd.f32 %v1228, %v1229
    %v1231 = vrot.slane %v1230, 2
    %v1232 = vadd.f32 %v1230, %v1231
    %v1233 = vrot.slane %v1232, 1
    %v1234 = vadd.f32 %v1232, %v1233
    %v1235 = vsel %vm85, %v1159, 0.0
    %v1236 = vrot.slane %v1235, 4
    %v1237 = vadd.f32 %v1235, %v1236
    %v1238 = vrot.slane %v1237, 2
    %v1239 = vadd.f32 %v1237, %v1238
    %v1240 = vrot.slane %v1239, 1
    %v1241 = vadd.f32 %v1239, %v1240
    %v1242 = vsel %vm85, %v1160, 0.0
    %v1243 = vrot.slane %v1242, 4
    %v1244 = vadd.f32 %v1242, %v1243
    %v1245 = vrot.slane %v1244, 2
    %v1246 = vadd.f32 %v1244, %v1245
    %v1247 = vrot.slane %v1246, 1
    %v1248 = vadd.f32 %v1246, %v1247
    %v1249 = vsel %vm85, %v1161, 0.0
    %v1250 = vrot.slane %v1249, 4
    %v1251 = vadd.f32 %v1249, %v1250
    %v1252 = vrot.slane %v1251, 2
    %v1253 = vadd.f32 %v1251, %v1252
    %v1254 = vrot.slane %v1253, 1
    %v1255 = vadd.f32 %v1253, %v1254
    %v1256 = vsel %vm85, %v1162, 0.0
    %v1257 = vrot.slane %v1256, 4
    %v1258 = vadd.f32 %v1256, %v1257
    %v1259 = vrot.slane %v1258, 2
    %v1260 = vadd.f32 %v1258, %v1259
    %v1261 = vrot.slane %v1260, 1
    %v1262 = vadd.f32 %v1260, %v1261
    %v1263 = vsel %vm85, %v1163, 0.0
    %v1264 = vrot.slane %v1263, 4
    %v1265 = vadd.f32 %v1263, %v1264
    %v1266 = vrot.slane %v1265, 2
    %v1267 = vadd.f32 %v1265, %v1266
    %v1268 = vrot.slane %v1267, 1
    %v1269 = vadd.f32 %v1267, %v1268
    %v1270 = vsel %vm85, %v1164, 0.0
    %v1271 = vrot.slane %v1270, 4
    %v1272 = vadd.f32 %v1270, %v1271
    %v1273 = vrot.slane %v1272, 2
    %v1274 = vadd.f32 %v1272, %v1273
    %v1275 = vrot.slane %v1274, 1
    %v1276 = vadd.f32 %v1274, %v1275
    %v1277 = vlaneseq
    %v1278 = vshrl.u32 %v1277, 7
    %v1279 = vsub.s32 2, %v1278
    %v1280 = vrot.slane %v76, %v1279
    %vm1297 = vcmask 1041409
    %v1298 = vsel %vm1297, %v1178, %v1171
    %vm1299 = vcmask 1042434
    %v1300 = vsel %vm1299, %v1185, %v1298
    %vm1301 = vcmask 1043459
    %v1302 = vsel %vm1301, %v1192, %v1300
    %vm1303 = vcmask 1044484
    %v1304 = vsel %vm1303, %v1199, %v1302
    %vm1305 = vcmask 1045509
    %v1306 = vsel %vm1305, %v1206, %v1304
    %vm1307 = vcmask 1046534
    %v1308 = vsel %vm1307, %v1213, %v1306
    %vm1309 = vcmask 1047559
    %v1310 = vsel %vm1309, %v1220, %v1308
    %v1311 = vsel %vm1297, %v1234, %v1227
    %v1312 = vsel %vm1299, %v1241, %v1311
    %v1313 = vsel %vm1301, %v1248, %v1312
    %v1314 = vsel %vm1303, %v1255, %v1313
    %v1315 = vsel %vm1305, %v1262, %v1314
    %v1316 = vsel %vm1307, %v1269, %v1315
    %v1317 = vsel %vm1309, %v1276, %v1316
    %v1318 = vsel %vm85, %v1310, 0
    %v1320 = vsel %vm85, %v1317, 0
    %1322 = vmatprep.subr.mxu0 0.0
    %1323 = vmatpush1.msra.mxu0 %v67
    %1324 = vmatprep.subr.mxu0 0.0
    %1325 = vmatpush1.msra.mxu0 %v68
    %1326 = vmatprep.subr.mxu0 0.0
    %1327 = vmatpush1.msra.mxu0 %v69
    %1328 = vmatprep.subr.mxu0 0.0
    %1329 = vmatpush1.msra.mxu0 %v70
    %1330 = vmatprep.subr.mxu0 0.0
    %1331 = vmatpush1.msra.mxu0 0.0
    %1332 = vmatprep.subr.mxu0 0.0
    %1333 = vmatpush1.msra.mxu0 0.0
    %1334 = vmatprep.subr.mxu0 0.0
    %1335 = vmatpush1.msra.mxu0 0.0
    %1336 = vmatprep.subr.mxu0 0.0
    %1337 = vmatpush1.msra.mxu0 0.0
    %1338 = vmatprep.subr.mxu0 0.0
    %1339 = vmatpush1.msra.mxu0 0.0
    %1340 = vmatprep.subr.mxu0 0.0
    %1341 = vmatpush1.msra.mxu0 0.0
    %1342 = vmatprep.subr.mxu0 0.0
    %1343 = vmatpush1.msra.mxu0 0.0
    %1344 = vmatprep.subr.mxu0 0.0
    %1345 = vmatpush1.msra.mxu0 0.0
    %1346 = vmatprep.subr.mxu0 0.0
    %1347 = vmatpush1.msra.mxu0 0.0
    %1348 = vmatprep.subr.mxu0 0.0
    %1349 = vmatpush1.msra.mxu0 0.0
    %1350 = vmatprep.subr.mxu0 0.0
    %1351 = vmatpush1.msra.mxu0 0.0
    %1352 = vmatprep.subr.mxu0 0.0
    %1353 = vmatpush1.msra.mxu0 0.0
    %1354 = vmatprep.subr.mxu0 0.0
    %1355 = vmatpush1.msra.mxu0 0.0
    %1356 = vmatprep.subr.mxu0 0.0
    %1357 = vmatpush1.msra.mxu0 0.0
    %1358 = vmatprep.subr.mxu0 0.0
    %1359 = vmatpush1.msra.mxu0 0.0
    %1360 = vmatprep.subr.mxu0 0.0
    %1361 = vmatpush1.msra.mxu0 0.0
    %1362 = vmatprep.subr.mxu0 0.0
    %1363 = vmatpush1.msra.mxu0 0.0
    %1364 = vmatprep.subr.mxu0 0.0
    %1365 = vmatpush1.msra.mxu0 0.0
    %1366 = vmatprep.subr.mxu0 0.0
    %1367 = vmatpush1.msra.mxu0 0.0
    %1368 = vmatprep.subr.mxu0 0.0
    %1369 = vmatpush1.msra.mxu0 0.0
    %1370 = vmatprep.subr.mxu0 0.0
    %1371 = vmatpush1.msra.mxu0 0.0
    %1372 = vmatprep.subr.mxu0 0.0
    %1373 = vmatpush1.msra.mxu0 0.0
    %1374 = vmatprep.subr.mxu0 0.0
    %1375 = vmatpush1.msra.mxu0 0.0
    %1376 = vmatprep.subr.mxu0 0.0
    %1377 = vmatpush1.msra.mxu0 0.0
    %1378 = vmatprep.subr.mxu0 0.0
    %1379 = vmatpush1.msra.mxu0 0.0
    %1380 = vmatprep.subr.mxu0 0.0
    %1381 = vmatpush1.msra.mxu0 0.0
    %1382 = vmatprep.subr.mxu0 0.0
    %1383 = vmatpush1.msra.mxu0 0.0
    %1384 = vmatprep.subr.mxu0 0.0
    %1385 = vmatpush1.msra.mxu0 0.0
    %1386 = vmatprep.mubr.f32.mxu0 0.0
    %1387 = vmatmul.mubr.f32.gmra.mrb[0].mxu0 %v1318
    %v1388 = vpop.f32.mrb[0].mxu0
    %v1389 = vadd.f32 %v1280, %v1388
    %v1390 = vpop.f32.mrb[0].mxu0
    %1391 = vmatprep.mubr.f32.mxu0 0.0
    %1392 = vmatmul.mubr.f32.gmra.mrb[0].mxu0 %v1320
    %v1393 = vpop.f32.mrb[0].mxu0
    %v1394 = vadd.f32 %v1280, %v1393
    %v1395 = vpop.f32.mrb[0].mxu0
    %1396 = vdwg.mxu0
    %v1397 = vadd.f32 %v1389, %v79
    %v1398 = vadd.f32 %v1394, %v80
    %v1399 = vsel %vm85, %v1397, 0.0
    %1400 = vadd.xlane.f32.xlu0 %v1399
    %v1401 = vpop.xlane.xlu0 %1400
    %v1402 = vsel %vm85, %v1398, 0.0
    %1403 = vadd.xlane.f32.xlu0 %v1402
    %v1404 = vpop.xlane.xlu0 %1403
    %v1405 = vrcp.pop 32.0
    %v1406 = vmul.f32 %v1401, %v1405
    %v1407 = vmul.f32 %v1404, %v1405
    %v1408 = vsub.f32 %v1397, %v1406
    %v1409 = vsub.f32 %v1398, %v1407
    %v1410 = vmul.f32 %v1408, %v1408
    %v1411 = vmul.f32 %v1409, %v1409
    %v1412 = vsel %vm85, %v1410, 0.0
    %1413 = vadd.xlane.f32.xlu0 %v1412
    %v1414 = vpop.xlane.xlu0 %1413
    %v1415 = vsel %vm85, %v1411, 0.0
    %1416 = vadd.xlane.f32.xlu0 %v1415
    %v1417 = vpop.xlane.xlu0 %1416
    %v1418 = vmul.f32 %v1414, %v1405
    %v1419 = vmul.f32 %v1417, %v1405
    %v1420 = vadd.f32 %v1418, 1e-05
    %v1421 = vadd.f32 %v1419, 1e-05
    %v1422 = vrsqrt.pop %v1420
    %v1423 = vrsqrt.pop %v1421
    %v1424 = vmul.f32 %v1408, %v1422
    %v1425 = vmul.f32 %v1409, %v1423
    %v1426 = vlaneseq
    %v1427 = vshrl.u32 %v1426, 7
    %v1428 = vsub.s32 3, %v1427
    %v1429 = vrot.slane %v76, %v1428
    %v1430 = vmul.f32 %v1424, %v1429
    %v1431 = vmul.f32 %v1425, %v1429
    %1433 = vrot.lane.b32.xlu0 %v1429, 96
    %v1434 = vpop.permute.xlu0 %1433
    %v1436 = vadd.f32 %v1430, %v1434
    %v1437 = vadd.f32 %v1431, %v1434
    %v1438 = vlaneseq
    %v1439 = vshrl.u32 %v1438, 7
    %v1440 = vsub.s32 4, %v1439
    %v1441 = vrot.slane %v76, %v1440
    %v1442 = vmul.f32 %v1436, %v1441
    %v1443 = vmul.f32 %v1437, %v1441
    %v1444 = vsel %vm85, %v1442, 0.0
    %1445 = vadd.xlane.f32.xlu0 %v1444
    %v1446 = vpop.xlane.xlu0 %1445
    %v1447 = vsel %vm85, %v1443, 0.0
    %1448 = vadd.xlane.f32.xlu0 %v1447
    %v1449 = vpop.xlane.xlu0 %1448
    %v1450 = vlaneseq
    %v1451 = vshrl.u32 %v1450, 7
    %v1452 = vsub.s32 5, %v1451
    %v1453 = vrot.slane %v76, %v1452
    %v1454 = vadd.f32 %v1446, %v1453
    %v1455 = vadd.f32 %v1449, %v1453
    %v1456 = vmax.f32 %v1454, 0.0
    %v1457 = vmax.f32 %v1455, 0.0
    %1459 = vset.pattern.permute.xlu0 0
    %1460 = vperm.xlu0 %1459, %v1456
    %v1461 = vpop.permute.xlu0 %1460
    %1464 = vset.pattern.permute.xlu0 0
    %1465 = vperm.xlu0 %1464, %v1457
    %v1466 = vpop.permute.xlu0 %1465
    %v1468 = vmul.f32 %v1461, %v1441
    %v1469 = vmul.f32 %v1466, %v1441
    %v1470 = vlaneseq
    %v1471 = vshrl.u32 %v1470, 7
    %v1472 = vsub.s32 6, %v1471
    %v1473 = vrot.slane %v76, %v1472
    %1475 = vrot.lane.b32.xlu0 %v1473, 32
    %v1476 = vpop.permute.xlu0 %1475
    %v1478 = vadd.f32 %v1468, %v1476
    %v1479 = vadd.f32 %v1469, %v1476
    %1482 = vrot.lane.b32.xlu0 %v1436, 32
    %v1483 = vpop.permute.xlu0 %1482
    %1484 = vrot.lane.b32.xlu0 %v1437, 32
    %v1485 = vpop.permute.xlu0 %1484
    %v1488 = vadd.f32 %v1478, %v1483
    %v1489 = vadd.f32 %v1479, %v1485
    %1492 = vrot.lane.b32.xlu0 %v1488, 96
    %v1493 = vpop.permute.xlu0 %1492
    %1494 = vrot.lane.b32.xlu0 %v1489, 96
    %v1495 = vpop.permute.xlu0 %1494
    %1500 = vrot.lane.b32.xlu0 %v67, 96
    %v1501 = vpop.permute.xlu0 %1500
    %1502 = vrot.lane.b32.xlu0 %v68, 96
    %v1503 = vpop.permute.xlu0 %1502
    %1504 = vrot.lane.b32.xlu0 %v69, 96
    %v1505 = vpop.permute.xlu0 %1504
    %1506 = vrot.lane.b32.xlu0 %v70, 96
    %v1507 = vpop.permute.xlu0 %1506
    %1514 = vrot.lane.b32.xlu0 %v244, 96
    %v1515 = vpop.permute.xlu0 %1514
    %1516 = vrot.lane.b32.xlu0 %v249, 96
    %v1517 = vpop.permute.xlu0 %1516
    %v1520 = vsel %vm85, %v1493, 0
    %v1522 = vsel %vm85, %v1495, 0
    %1524 = vmatprep.subr.mxu0 0.0
    %1525 = vmatpush1.msra.mxu0 %v1501
    %1526 = vmatprep.subr.mxu0 0.0
    %1527 = vmatpush1.msra.mxu0 %v1503
    %1528 = vmatprep.subr.mxu0 0.0
    %1529 = vmatpush1.msra.mxu0 %v1505
    %1530 = vmatprep.subr.mxu0 0.0
    %1531 = vmatpush1.msra.mxu0 %v1507
    %1532 = vmatprep.subr.mxu0 0.0
    %1533 = vmatpush1.msra.mxu0 0.0
    %1534 = vmatprep.subr.mxu0 0.0
    %1535 = vmatpush1.msra.mxu0 0.0
    %1536 = vmatprep.subr.mxu0 0.0
    %1537 = vmatpush1.msra.mxu0 0.0
    %1538 = vmatprep.subr.mxu0 0.0
    %1539 = vmatpush1.msra.mxu0 0.0
    %1540 = vmatprep.subr.mxu0 0.0
    %1541 = vmatpush1.msra.mxu0 0.0
    %1542 = vmatprep.subr.mxu0 0.0
    %1543 = vmatpush1.msra.mxu0 0.0
    %1544 = vmatprep.subr.mxu0 0.0
    %1545 = vmatpush1.msra.mxu0 0.0
    %1546 = vmatprep.subr.mxu0 0.0
    %1547 = vmatpush1.msra.mxu0 0.0
    %1548 = vmatprep.subr.mxu0 0.0
    %1549 = vmatpush1.msra.mxu0 0.0
    %1550 = vmatprep.subr.mxu0 0.0
    %1551 = vmatpush1.msra.mxu0 0.0
    %1552 = vmatprep.subr.mxu0 0.0
    %1553 = vmatpush1.msra.mxu0 0.0
    %1554 = vmatprep.subr.mxu0 0.0
    %1555 = vmatpush1.msra.mxu0 0.0
    %1556 = vmatprep.subr.mxu0 0.0
    %1557 = vmatpush1.msra.mxu0 0.0
    %1558 = vmatprep.subr.mxu0 0.0
    %1559 = vmatpush1.msra.mxu0 0.0
    %1560 = vmatprep.subr.mxu0 0.0
    %1561 = vmatpush1.msra.mxu0 0.0
    %1562 = vmatprep.subr.mxu0 0.0
    %1563 = vmatpush1.msra.mxu0 0.0
    %1564 = vmatprep.subr.mxu0 0.0
    %1565 = vmatpush1.msra.mxu0 0.0
    %1566 = vmatprep.subr.mxu0 0.0
    %1567 = vmatpush1.msra.mxu0 0.0
    %1568 = vmatprep.subr.mxu0 0.0
    %1569 = vmatpush1.msra.mxu0 0.0
    %1570 = vmatprep.subr.mxu0 0.0
    %1571 = vmatpush1.msra.mxu0 0.0
    %1572 = vmatprep.subr.mxu0 0.0
    %1573 = vmatpush1.msra.mxu0 0.0
    %1574 = vmatprep.subr.mxu0 0.0
    %1575 = vmatpush1.msra.mxu0 0.0
    %1576 = vmatprep.subr.mxu0 0.0
    %1577 = vmatpush1.msra.mxu0 0.0
    %1578 = vmatprep.subr.mxu0 0.0
    %1579 = vmatpush1.msra.mxu0 0.0
    %1580 = vmatprep.subr.mxu0 0.0
    %1581 = vmatpush1.msra.mxu0 0.0
    %1582 = vmatprep.subr.mxu0 0.0
    %1583 = vmatpush1.msra.mxu0 0.0
    %1584 = vmatprep.subr.mxu0 0.0
    %1585 = vmatpush1.msra.mxu0 0.0
    %1586 = vmatprep.subr.mxu0 0.0
    %1587 = vmatpush1.msra.mxu0 0.0
    %1588 = vmatprep.mubr.f32.mxu0 0.0
    %1589 = vmatmul.mubr.f32.gmra.mrb[0].mxu0 %v1520
    %v1590 = vpop.f32.mrb[0].mxu0
    %v1591 = vadd.f32 %v1515, %v1590
    %v1592 = vpop.f32.mrb[0].mxu0
    %1593 = vmatprep.mubr.f32.mxu0 0.0
    %1594 = vmatmul.mubr.f32.gmra.mrb[0].mxu0 %v1522
    %v1595 = vpop.f32.mrb[0].mxu0
    %v1596 = vadd.f32 %v1517, %v1595
    %v1597 = vpop.f32.mrb[0].mxu0
    %1598 = vdwg.mxu0
    %v1599 = vxor.u32 %v1591, 2147483648
    %v1600 = vxor.u32 %v1596, 2147483648
    %v1601 = vmul.f32 %v1599, 1.442695
    %v1602 = vpow.pop %v1601
    %v1603 = vmul.f32 %v1600, 1.442695
    %v1604 = vpow.pop %v1603
    %v1605 = vadd.f32 %v1602, 1.0
    %v1606 = vadd.f32 %v1604, 1.0
    %v1607 = vrcp.pop %v1605
    %v1608 = vmul.f32 1.0, %v1607
    %v1609 = vrcp.pop %v1606
    %v1610 = vmul.f32 1.0, %v1609
    %1613 = vrot.lane.b32.xlu0 %v1608, 32
    %v1614 = vpop.permute.xlu0 %1613
    %1615 = vrot.lane.b32.xlu0 %v1610, 32
    %v1616 = vpop.permute.xlu0 %1615
    %v1619 = vmul.f32 %v1488, %v1614
    %v1620 = vmul.f32 %v1489, %v1616
    %v1621 = vrot.slane %v1489, 7
    %v1622 = vsel %vm1297, %v1621, %v1488
    %1623 = vrot.lane.b32.xlu0 %v1622, 96
    %v1624 = vpop.permute.xlu0 %1623
    %v1626 = vrot.slane %v1488, 1
    %v1627 = vsel %vm1297, %v1489, %v1626
    %v1629 = vrot.slane %v1488, 2
    %v1630 = vrot.slane %v1489, 1
    %v1631 = vsel %vm1297, %v1630, %v1629
    %1632 = vrot.lane.b32.xlu0 %v1631, 32
    %v1633 = vpop.permute.xlu0 %1632
    %v1635 = vrot.slane %v1488, 3
    %v1636 = vrot.slane %v1489, 2
    %v1637 = vsel %vm1297, %v1636, %v1635
    %1638 = vrot.lane.b32.xlu0 %v1637, 64
    %v1639 = vpop.permute.xlu0 %1638
    %v1641 = vrot.slane %v1488, 4
    %v1642 = vrot.slane %v1489, 3
    %v1643 = vsel %vm1297, %v1642, %v1641
    %1644 = vrot.lane.b32.xlu0 %v1643, 96
    %v1645 = vpop.permute.xlu0 %1644
    %v1647 = vrot.slane %v1488, 5
    %v1648 = vrot.slane %v1489, 4
    %v1649 = vsel %vm1297, %v1648, %v1647
    %v1651 = vrot.slane %v1488, 6
    %v1652 = vrot.slane %v1489, 5
    %v1653 = vsel %vm1297, %v1652, %v1651
    %1654 = vrot.lane.b32.xlu0 %v1653, 32
    %v1655 = vpop.permute.xlu0 %1654
    %v1657 = vrot.slane %v1488, 7
    %v1658 = vrot.slane %v1489, 6
    %v1659 = vsel %vm1297, %v1658, %v1657
    %1660 = vrot.lane.b32.xlu0 %v1659, 64
    %v1661 = vpop.permute.xlu0 %1660
    %v1663 = vsel %vm85, %v1624, %v1627
    %vm1664 = vcmask 523264
    %v1665 = vsel %vm1664, %v1663, %v1633
    %vm1666 = vcmask 785408
    %v1667 = vsel %vm1666, %v1665, %v1639
    %v1668 = vsel %vm85, %v1645, %v1649
    %v1669 = vsel %vm1664, %v1668, %v1655
    %v1670 = vsel %vm1666, %v1669, %v1661
    %v1673 = vcombine.low %v1667, %v1670
    %v1675 = vunpack.c.l.s4 1983009808
    %v1676 = vunpack.c.0.s8 %v1675
    %v1677 = vlaneseq
    %v1678 = vshrl.u32 %v1677, 7
    %v1679 = vsub.s32 %v1676, %v1678
    %v1680 = vrot.slane %v1673, %v1679
    %1682 = vst [vmem:[#allocation8] sm:$0xf] %v1680
    %v1685 = vrot.slane %v1620, 7
    %v1686 = vsel %vm1297, %v1685, %v1619
    %1687 = vrot.lane.b32.xlu0 %v1686, 96
    %v1688 = vpop.permute.xlu0 %1687
    %v1690 = vrot.slane %v1619, 1
    %v1691 = vsel %vm1297, %v1620, %v1690
    %v1693 = vrot.slane %v1619, 2
    %v1694 = vrot.slane %v1620, 1
    %v1695 = vsel %vm1297, %v1694, %v1693
    %1696 = vrot.lane.b32.xlu0 %v1695, 32
    %v1697 = vpop.permute.xlu0 %1696
    %v1699 = vrot.slane %v1619, 3
    %v1700 = vrot.slane %v1620, 2
    %v1701 = vsel %vm1297, %v1700, %v1699
    %1702 = vrot.lane.b32.xlu0 %v1701, 64
    %v1703 = vpop.permute.xlu0 %1702
    %v1705 = vrot.slane %v1619, 4
    %v1706 = vrot.slane %v1620, 3
    %v1707 = vsel %vm1297, %v1706, %v1705
    %1708 = vrot.lane.b32.xlu0 %v1707, 96
    %v1709 = vpop.permute.xlu0 %1708
    %v1711 = vrot.slane %v1619, 5
    %v1712 = vrot.slane %v1620, 4
    %v1713 = vsel %vm1297, %v1712, %v1711
    %v1715 = vrot.slane %v1619, 6
    %v1716 = vrot.slane %v1620, 5
    %v1717 = vsel %vm1297, %v1716, %v1715
    %1718 = vrot.lane.b32.xlu0 %v1717, 32
    %v1719 = vpop.permute.xlu0 %1718
    %v1721 = vrot.slane %v1619, 7
    %v1722 = vrot.slane %v1620, 6
    %v1723 = vsel %vm1297, %v1722, %v1721
    %1724 = vrot.lane.b32.xlu0 %v1723, 64
    %v1725 = vpop.permute.xlu0 %1724
    %v1727 = vsel %vm85, %v1688, %v1691
    %v1728 = vsel %vm1664, %v1727, %v1697
    %v1729 = vsel %vm1666, %v1728, %v1703
    %v1730 = vsel %vm85, %v1709, %v1713
    %v1731 = vsel %vm1664, %v1730, %v1719
    %v1732 = vsel %vm1666, %v1731, %v1725
    %v1735 = vcombine.low %v1729, %v1732
    %v1737 = vunpack.c.l.s4 1983009808
    %v1738 = vunpack.c.0.s8 %v1737
    %v1739 = vlaneseq
    %v1740 = vshrl.u32 %v1739, 7
    %v1741 = vsub.s32 %v1738, %v1740
    %v1742 = vrot.slane %v1735, %v1741
    %1744 = vst [vmem:[#allocation9] sm:$0xf] %v1742
    // Predicated region
    $region26: #{tpu_custom_call.1} parent=1 // pred_check
      _
    $region27: #{tpu_custom_call.1} parent=1 // pred_check_branch
      %1746 = sbr.rel (0) target = $region29
    $region28: #{tpu_custom_call.1} parent=1 // pred_region
      %s1748 = ssub.s32 64, 64
      %1749 = vsyncadd [#allocation4], %s1748
      %s1751 = sshll.u32 [#allocation8], 4
      %s1752 = int_to_ptr.vmem [resolvable:$true] %s1751
      %1754 = dma.vmem_to_hbm [thread:$0]  %s1752, 64, %s3, [#allocation4]
    $region29: #{tpu_custom_call.1} parent=1 // pred_fallthru
      _
    // Predicated region
    $region30: #{tpu_custom_call.1} parent=1 // pred_check
      _
    $region31: #{tpu_custom_call.1} parent=1 // pred_check_branch
      %1756 = sbr.rel (0) target = $region33
    $region32: #{tpu_custom_call.1} parent=1 // pred_region
      %s1758 = ssub.s32 64, 64
      %1759 = vsyncadd [#allocation10], %s1758
      %s1761 = sshll.u32 [#allocation9], 4
      %s1762 = int_to_ptr.vmem [resolvable:$true] %s1761
      %1764 = dma.vmem_to_hbm [thread:$0]  %s1762, 64, %s4, [#allocation10]
    $region33: #{tpu_custom_call.1} parent=1 // pred_fallthru
      _
    // Predicated region
    $region34: #{tpu_custom_call.1} parent=1 // pred_check
      _
    $region35: #{tpu_custom_call.1} parent=1 // pred_check_branch
      %1766 = sbr.rel (0) target = $region37
    $region36: #{tpu_custom_call.1} parent=1 // pred_region
      %1767 = dma.done [#allocation4], 64
    $region37: #{tpu_custom_call.1} parent=1 // pred_fallthru
      _
    // Predicated region
    $region38: #{tpu_custom_call.1} parent=1 // pred_check
      _
    $region39: #{tpu_custom_call.1} parent=1 // pred_check_branch
      %1769 = sbr.rel (0) target = $region41
    $region40: #{tpu_custom_call.1} parent=1 // pred_region
      %1770 = dma.done [#allocation10], 64
    $region41: #{tpu_custom_call.1} parent=1 // pred_fallthru
      _
    %1771 = vsyncpa [#allocation3], 1
    %1772 = vsyncpa [#allocation6], 1
    %1773 = vsyncpa [#allocation4], 1
    %1774 = vsyncpa [#allocation10], 1

</llo_original>
